<compile_context>
chip_gen: v7x
topology: tpu7x:2x2x1
jax: 0.10.0
libtpu: 0.0.40
codegen_flags: <defaults>
</compile_context>

<pallas_src>
import math
import functools

import jax
import jax.numpy as jnp
from jax.experimental import pallas as pl
from jax.experimental.pallas import tpu as pltpu

PAD_IDX = 0


# ----------------------------------------------------------------------------
# In-kernel helpers
# ----------------------------------------------------------------------------
def _layernorm(x, gamma, beta, eps=1e-5):
    # PyTorch nn.LayerNorm: biased variance over last dim, eps inside sqrt.
    mean = jnp.mean(x, axis=-1, keepdims=True)
    var = jnp.mean((x - mean) ** 2, axis=-1, keepdims=True)
    return (x - mean) * jax.lax.rsqrt(var + eps) * gamma + beta


# ----------------------------------------------------------------------------
# Pallas kernel: whole transformer stack.  Grid = (batch, num_layers); one body
# invocation = one layer for one batch element.  The residual stream is carried
# across the layer axis in a VMEM scratch (no per-layer HBM round trip).
# ----------------------------------------------------------------------------
def transformer_stack_kernel(h_ref, kpad_ref,
                             wqkv_ref, bqkv_ref, wo_ref, bo_ref,
                             w1_ref, b1_ref, w2_ref, b2_ref,
                             g_ref, be_ref,
                             o_ref, hcar_ref, *, num_heads):
    layer = pl.program_id(1)

    # first layer for this batch element: load h from HBM block into the carry
    @pl.when(layer == 0)
    def _init():
        hcar_ref[...] = h_ref[0]

    h = hcar_ref[...]                          # (L, E) f32 residual stream
    L, E = h.shape
    dh = E // num_heads
    scale = 1.0 / math.sqrt(dh)

    # ---- causal + key-padding additive bias, built in-kernel (no (N,L,L) from HBM)
    kp_bias = kpad_ref[0] * jnp.float32(-1e9)                     # (1, L), -1e9 at pad keys
    row = jax.lax.broadcasted_iota(jnp.int32, (L, L), 0)          # query index
    col = jax.lax.broadcasted_iota(jnp.int32, (L, L), 1)          # key index
    bias = jnp.where(col > row, jnp.float32(-1e9), kp_bias)       # (L, L) additive bias

    # ---- fused QKV projection: ONE (L,E)@(E,3E) bf16 matmul, f32 accumulation
    h_bf = h.astype(jnp.bfloat16)
    qkv = jnp.dot(h_bf, wqkv_ref[0],
                  preferred_element_type=jnp.float32) + bqkv_ref[0]       # (L, 3E) f32
    q = qkv[:, 0 * E:1 * E] * scale
    k = qkv[:, 1 * E:2 * E]
    v = qkv[:, 2 * E:3 * E]

    # ---- multi-head attention.  Per-head contexts are concatenated in registers
    # (lane-dense) so the output projection is a single full-K (L,E)@(E,E) matmul
    # and no VMEM slab / masked partial stores are needed.
    # TODO(synk): for long sequences add flash-style query tiling (online softmax,
    # (Tq,L) score tiles) and a fori_loop/batched-head formulation so the (L,L)
    # scores never live whole in VMEM (v7x: 64 MiB) and vreg pressure stays bounded.
    ctxs = []
    for hh in range(num_heads):
        sl = slice(hh * dh, (hh + 1) * dh)
        qh = q[:, sl].astype(jnp.bfloat16)                        # (L, dh)
        kh = k[:, sl].astype(jnp.bfloat16)                        # (L, dh)
        vh = v[:, sl].astype(jnp.bfloat16)                        # (L, dh)
        s = jax.lax.dot_general(qh, kh, (((1,), (1,)), ((), ())),
                                preferred_element_type=jnp.float32) + bias  # (L, L)
        s = s - jnp.max(s, axis=-1, keepdims=True)
        p = jnp.exp(s)
        p = p * pl.reciprocal(jnp.sum(p, axis=-1, keepdims=True), approx=True)
        ctxs.append(jnp.dot(p.astype(jnp.bfloat16), vh,
                            preferred_element_type=jnp.float32))  # (L, dh)
    ctx = jnp.concatenate(ctxs, axis=-1)                          # (L, E), lane-dense

    # ---- single full-contraction output projection
    attn = jnp.dot(ctx.astype(jnp.bfloat16), wo_ref[0],
                   preferred_element_type=jnp.float32) + bo_ref[0]

    gamma = g_ref[...]
    beta = be_ref[...]

    # residual + (shared) LayerNorm 1  (f32 math)
    x = _layernorm(h + attn, gamma, beta)

    # feed-forward: Linear -> ReLU -> Linear (bf16 operands, f32 accumulation)
    f = jnp.dot(x.astype(jnp.bfloat16), w1_ref[0],
                preferred_element_type=jnp.float32) + b1_ref[0]
    f = jnp.maximum(f, 0.0)
    f = jnp.dot(f.astype(jnp.bfloat16), w2_ref[0],
                preferred_element_type=jnp.float32) + b2_ref[0]

    # residual + (shared) LayerNorm 2
    y = _layernorm(f + x, gamma, beta)
    hcar_ref[...] = y                                              # carry to next layer

    @pl.when(layer == pl.num_programs(1) - 1)
    def _finalize():
        o_ref[0] = y.astype(o_ref.dtype)


def _vmem_limit_bytes(L, E, FF):
    """Scoped-VMEM budget from the actual working set, capped at device VMEM."""
    w_bf16 = 2 * (E * 3 * E + E * E + E * FF + FF * E)       # one layer of bf16 weights
    b_f32 = 4 * (3 * E + E + FF + E + 2 * E)                 # biases + LN params
    io_f32 = 4 * (2 * L * E + L)                             # h in block + out block + kpad
    act_f32 = 4 * (L * 3 * E + 6 * L * E + L * FF + 4 * L * L)   # in-kernel temporaries
    # weights/io double-buffered by the pipeline; generous headroom for compiler scratch
    need = 2 * (w_bf16 + b_f32 + io_f32) + 2 * act_f32 + (16 << 20)
    try:
        cap = int(pltpu.get_tpu_info().vmem_capacity_bytes)
    except Exception:
        cap = 64 * 1024 * 1024                               # safe on every generation
    return int(min(need, cap))


def transformer_stack(h, kpad, stacked, ln_gamma, ln_beta, num_heads):
    """Whole transformer stack in one pallas_call; grid = (batch, num_layers)."""
    N, L, E = h.shape
    num_layers = stacked["wqkv"].shape[0]
    FF = stacked["w1"].shape[-1]
    assert E % num_heads == 0, "dim_emb must be divisible by num_heads"

    def lw(shape):
        # layer-streamed weight: block index follows the layer grid axis so the
        # default double-buffering prefetches layer l+1 while layer l computes.
        return pl.BlockSpec((1,) + shape, lambda n, l: (l,) + (0,) * len(shape))

    in_specs = [
        pl.BlockSpec((1, L, E), lambda n, l: (n, 0, 0)),   # h (token+pos embedding)
        pl.BlockSpec((1, 1, L), lambda n, l: (n, 0, 0)),   # key-pad flags (N,1,L)
        lw((E, 3 * E)), lw((1, 3 * E)),                    # fused wqkv (bf16), bqkv (f32)
        lw((E, E)), lw((1, E)),                            # wo, bo
        lw((E, FF)), lw((1, FF)),                          # w1, b1
        lw((FF, E)), lw((1, E)),                           # w2, b2
        pl.BlockSpec((1, E), lambda n, l: (0, 0)),         # ln gamma (shared)
        pl.BlockSpec((1, E), lambda n, l: (0, 0)),         # ln beta  (shared)
    ]

    kernel = functools.partial(transformer_stack_kernel, num_heads=num_heads)
    return pl.pallas_call(
        kernel,
        out_shape=jax.ShapeDtypeStruct((N, L, E), jnp.float32),
        grid_spec=pltpu.PrefetchScalarGridSpec(
            num_scalar_prefetch=0,
            grid=(N, num_layers),
            in_specs=in_specs,
            out_specs=pl.BlockSpec((1, L, E), lambda n, l: (n, 0, 0)),
            scratch_shapes=[pltpu.VMEM((L, E), jnp.float32)],   # residual-stream carry
        ),
        compiler_params=pltpu.CompilerParams(
            dimension_semantics=("parallel", "arbitrary"),
            vmem_limit_bytes=_vmem_limit_bytes(L, E, FF)),
    )(h, kpad,
      stacked["wqkv"], stacked["bqkv"], stacked["wo"], stacked["bo"],
      stacked["w1"], stacked["b1"], stacked["w2"], stacked["b2"],
      ln_gamma, ln_beta)


# ----------------------------------------------------------------------------
# Plain-JAX glue: embedding + pad flags, weight stacking, then the Pallas stack
# ----------------------------------------------------------------------------
def _stack_layer_params(layers):
    """Stack per-layer weights along a leading layer axis; fuse in_proj; cast to bf16."""
    def stack(fn):
        return jnp.stack([fn(lp) for lp in layers], axis=0)
    return dict(
        wqkv=stack(lambda lp: jnp.concatenate([lp["wq"], lp["wk"], lp["wv"]],
                                              axis=1)).astype(jnp.bfloat16),
        bqkv=stack(lambda lp: jnp.concatenate([lp["bq"], lp["bk"], lp["bv"]], axis=1)),
        wo=stack(lambda lp: lp["wo"]).astype(jnp.bfloat16),
        bo=stack(lambda lp: lp["bo"]),
        w1=stack(lambda lp: lp["w1"]).astype(jnp.bfloat16),
        b1=stack(lambda lp: lp["b1"]),
        w2=stack(lambda lp: lp["w2"]).astype(jnp.bfloat16),
        b2=stack(lambda lp: lp["b2"]),
    )


def transformer_forward(seq, params, num_heads):
    N, L = seq.shape
    emb = params["emb"]
    vocab_size = params["vocab_size"]

    # stack_pos_enc + embedding + sum(dim=2): token emb + position emb
    pos_ids = jnp.arange(vocab_size + 1, vocab_size + 1 + L)      # (L,)
    tok_emb = jnp.take(emb, seq, axis=0)                          # (N, L, E)
    pos_emb = jnp.take(emb, pos_ids, axis=0)                      # (L, E)
    h = (tok_emb + pos_emb[None, :, :]).astype(jnp.float32)       # dropout = identity (eval)

    # setup_masks: only the (N,1,L) key-pad flags leave HBM; the full
    # causal+pad additive bias is rebuilt inside the kernel.
    kpad = (seq == PAD_IDX).astype(jnp.float32)[:, None, :]       # (N, 1, L)

    stacked = _stack_layer_params(params["layers"])
    return transformer_stack(h, kpad, stacked,
                             params["ln_gamma"], params["ln_beta"], num_heads)


# ----------------------------------------------------------------------------
# Pure-JAX f32 reference (correctness check only)
# ----------------------------------------------------------------------------
def reference_forward(seq, params, num_heads):
    N, L = seq.shape
    emb = params["emb"]
    vocab_size = params["vocab_size"]
    pos_ids = jnp.arange(vocab_size + 1, vocab_size + 1 + L)
    h = jnp.take(emb, seq, axis=0) + jnp.take(emb, pos_ids, axis=0)[None]
    key_pad = (seq == PAD_IDX)
    causal = jnp.triu(jnp.ones((L, L), dtype=bool), k=1)
    bias = jnp.where(causal[None] | key_pad[:, None, :], -1e9, 0.0).astype(jnp.float32)

    gamma, beta = params["ln_gamma"], params["ln_beta"]
    for lp in params["layers"]:
        E = h.shape[-1]
        dh = E // num_heads
        q = h @ lp["wq"] + lp["bq"]
        k = h @ lp["wk"] + lp["bk"]
        v = h @ lp["wv"] + lp["bv"]
        q = q.reshape(N, L, num_heads, dh).transpose(0, 2, 1, 3)
        k = k.reshape(N, L, num_heads, dh).transpose(0, 2, 1, 3)
        v = v.reshape(N, L, num_heads, dh).transpose(0, 2, 1, 3)
        s = jnp.einsum("nhld,nhmd->nhlm", q, k) / math.sqrt(dh) + bias[:, None]
        p = jax.nn.softmax(s, axis=-1)
        o = jnp.einsum("nhlm,nhmd->nhld", p, v).transpose(0, 2, 1, 3).reshape(N, L, E)
        o = o @ lp["wo"] + lp["bo"]
        x = _layernorm(h + o, gamma, beta)
        f = jnp.maximum(x @ lp["w1"] + lp["b1"], 0.0) @ lp["w2"] + lp["b2"]
        h = _layernorm(f + x, gamma, beta)
    return h


# ----------------------------------------------------------------------------
# Deterministic parameter init (shapes follow the PyTorch __init__)
# ----------------------------------------------------------------------------
def init_params(key, vocab_size, num_context, dim_emb, dim_ff, num_layers):
    keys = jax.random.split(key, 1 + num_layers)
    emb = 0.02 * jax.random.normal(
        keys[0], (vocab_size + num_context + 1, dim_emb), jnp.float32)
    emb = emb.at[PAD_IDX].set(0.0)   # padding_idx row is zero

    s = 1.0 / math.sqrt(dim_emb)
    layers = []
    for l in range(num_layers):
        ks = jax.random.split(keys[1 + l], 10)
        layers.append(dict(
            # in_proj split into q/k/v, stored transposed so kernel does x @ W
            wq=s * jax.random.normal(ks[0], (dim_emb, dim_emb), jnp.float32),
            bq=0.01 * jax.random.normal(ks[1], (1, dim_emb), jnp.float32),
            wk=s * jax.random.normal(ks[2], (dim_emb, dim_emb), jnp.float32),
            bk=0.01 * jax.random.normal(ks[3], (1, dim_emb), jnp.float32),
            wv=s * jax.random.normal(ks[4], (dim_emb, dim_emb), jnp.float32),
            bv=0.01 * jax.random.normal(ks[5], (1, dim_emb), jnp.float32),
            wo=s * jax.random.normal(ks[6], (dim_emb, dim_emb), jnp.float32),
            bo=0.01 * jax.random.normal(ks[7], (1, dim_emb), jnp.float32),
            w1=s * jax.random.normal(ks[8], (dim_emb, dim_ff), jnp.float32),
            b1=jnp.zeros((1, dim_ff), jnp.float32),
            w2=(1.0 / math.sqrt(dim_ff))
               * jax.random.normal(ks[9], (dim_ff, dim_emb), jnp.float32),
            b2=jnp.zeros((1, dim_emb), jnp.float32),
        ))
    return dict(
        emb=emb,
        ln_gamma=jnp.ones((1, dim_emb), jnp.float32),   # nn.LayerNorm default init,
        ln_beta=jnp.zeros((1, dim_emb), jnp.float32),   # shared across all norm layers
        layers=layers,
        vocab_size=vocab_size,
    )


if __name__ == "__main__":
    # Small but lane-dense shapes (E, FF multiples of 128); N even so both v7x TCs work.
    N, L = 2, 16                   # batch, sequence length
    DIM_EMB, DIM_FF = 128, 256
    NUM_HEADS, NUM_LAYERS = 4, 2
    VOCAB_SIZE = 32
    NUM_CONTEXT = L                # positions use indices vocab+1 .. vocab+L

    root = jax.random.PRNGKey(0)
    k_param, k_seq = jax.random.split(root)
    params = init_params(k_param, VOCAB_SIZE, NUM_CONTEXT, DIM_EMB, DIM_FF, NUM_LAYERS)

    seq = jax.random.randint(k_seq, (N, L), 1, VOCAB_SIZE, dtype=jnp.int32)
    seq = seq.at[1, 5].set(PAD_IDX)   # exercise the key-padding mask

    out = transformer_forward(seq, params, NUM_HEADS)
    out = jax.block_until_ready(out)
    assert out.shape == (N, L, DIM_EMB), out.shape

    ref = jax.block_until_ready(reference_forward(seq, params, NUM_HEADS))
    max_err = float(jnp.max(jnp.abs(out - ref)))
    # bf16 matmul operands with f32 accumulation (+ approx softmax reciprocal)
    # vs. a pure-f32 reference
    assert jnp.allclose(out, ref, atol=5e-2, rtol=5e-2), "max abs err = %f" % max_err

    print("KERNEL_OK")
</pallas_src>

<mosaic_0001>
module attributes {stable_mosaic.version = 11 : i64} {
  func.func @transformer_stack_kernel(%arg0: i32, %arg1: i32, %arg2: memref<1x16x128xf32, #tpu.memory_space<vmem>>, %arg3: memref<1x1x16xf32, #tpu.memory_space<vmem>>, %arg4: memref<1x128x384xbf16, #tpu.memory_space<vmem>>, %arg5: memref<1x1x384xf32, #tpu.memory_space<vmem>>, %arg6: memref<1x128x128xbf16, #tpu.memory_space<vmem>>, %arg7: memref<1x1x128xf32, #tpu.memory_space<vmem>>, %arg8: memref<1x128x256xbf16, #tpu.memory_space<vmem>>, %arg9: memref<1x1x256xf32, #tpu.memory_space<vmem>>, %arg10: memref<1x256x128xbf16, #tpu.memory_space<vmem>>, %arg11: memref<1x1x128xf32, #tpu.memory_space<vmem>>, %arg12: memref<1x128xf32, #tpu.memory_space<vmem>>, %arg13: memref<1x128xf32, #tpu.memory_space<vmem>>, %arg14: memref<1x16x128xf32, #tpu.memory_space<vmem>>, %arg15: memref<16x128xf32, #tpu.memory_space<vmem>>) attributes {dimension_semantics = [#tpu.dimension_semantics<parallel>, #tpu.dimension_semantics<arbitrary>], iteration_bounds = array<i64: 2, 2>, scalar_prefetch = 0 : i64, scratch_operands = 1 : i64, tpu.core_type = #tpu.core_type<tc>, window_params = [{transform_indices = @transform_0, window_bounds = array<i64: 1, 16, 128>}, {transform_indices = @transform_1, window_bounds = array<i64: 1, 1, 16>}, {transform_indices = @transform_2, window_bounds = array<i64: 1, 128, 384>}, {transform_indices = @transform_3, window_bounds = array<i64: 1, 1, 384>}, {transform_indices = @transform_4, window_bounds = array<i64: 1, 128, 128>}, {transform_indices = @transform_5, window_bounds = array<i64: 1, 1, 128>}, {transform_indices = @transform_6, window_bounds = array<i64: 1, 128, 256>}, {transform_indices = @transform_7, window_bounds = array<i64: 1, 1, 256>}, {transform_indices = @transform_8, window_bounds = array<i64: 1, 256, 128>}, {transform_indices = @transform_9, window_bounds = array<i64: 1, 1, 128>}, {pipeline_mode = #tpu.pipeline_mode<synchronous>, transform_indices = @transform_10, window_bounds = array<i64: 1, 128>}, {pipeline_mode = #tpu.pipeline_mode<synchronous>, transform_indices = @transform_11, window_bounds = array<i64: 1, 128>}, {transform_indices = @transform_12, window_bounds = array<i64: 1, 16, 128>}]} {
    %c0_i32 = arith.constant 0 : i32
    %0 = arith.cmpi eq, %arg1, %c0_i32 : i32
    %1 = arith.extui %0 : i1 to i32
    %c0_i32_0 = arith.constant 0 : i32
    %2 = arith.cmpi ne, %1, %c0_i32_0 : i32
    scf.if %2 {
      %c0_69 = arith.constant 0 : index
      %c0_70 = arith.constant 0 : index
      %c0_71 = arith.constant 0 : index
      %187 = vector.load %arg2[%c0_69, %c0_70, %c0_71] : memref<1x16x128xf32, #tpu.memory_space<vmem>>, vector<1x16x128xf32>
      %188 = vector.shape_cast %187 : vector<1x16x128xf32> to vector<16x128xf32>
      %c0_72 = arith.constant 0 : index
      %c0_73 = arith.constant 0 : index
      %189 = vector.load %arg15[%c0_72, %c0_73] : memref<16x128xf32, #tpu.memory_space<vmem>>, vector<16x128xf32>
      tpu.vector_store %arg15[%c0_72, %c0_73], %188 {strides = array<i32>} : memref<16x128xf32, #tpu.memory_space<vmem>>, vector<16x128xf32>,
    } else {
    }
    %c0 = arith.constant 0 : index
    %c0_1 = arith.constant 0 : index
    %3 = vector.load %arg15[%c0, %c0_1] : memref<16x128xf32, #tpu.memory_space<vmem>>, vector<16x128xf32>
    %c0_2 = arith.constant 0 : index
    %c0_3 = arith.constant 0 : index
    %c0_4 = arith.constant 0 : index
    %4 = vector.load %arg3[%c0_2, %c0_3, %c0_4] : memref<1x1x16xf32, #tpu.memory_space<vmem>>, vector<1x1x16xf32>
    %5 = vector.shape_cast %4 : vector<1x1x16xf32> to vector<1x16xf32>
    %cst = arith.constant -1.000000e+09 : f32
    %6 = vector.broadcast %cst : f32 to vector<1x16xf32>
    %7 = arith.mulf %5, %6 : vector<1x16xf32>
    %8 = tpu.iota {dimensions = array<i32: 0>} : vector<16x16xi32>
    %9 = tpu.iota {dimensions = array<i32: 1>} : vector<16x16xi32>
    %10 = arith.cmpi sgt, %9, %8 : vector<16x16xi32>
    %cst_5 = arith.constant -1.000000e+09 : f32
    %11 = vector.broadcast %cst_5 : f32 to vector<16x16xf32>
    %12 = vector.shape_cast %7 : vector<1x16xf32> to vector<1x16xf32>
    %13 = vector.broadcast %12 : vector<1x16xf32> to vector<16x16xf32>
    %14 = arith.select %10, %11, %13 : vector<16x16xi1>, vector<16x16xf32>
    %15 = arith.truncf %3 : vector<16x128xf32> to vector<16x128xbf16>
    %c0_6 = arith.constant 0 : index
    %c0_7 = arith.constant 0 : index
    %c0_8 = arith.constant 0 : index
    %16 = vector.load %arg4[%c0_6, %c0_7, %c0_8] : memref<1x128x384xbf16, #tpu.memory_space<vmem>>, vector<1x128x384xbf16>
    %17 = vector.shape_cast %16 : vector<1x128x384xbf16> to vector<128x384xbf16>
    %cst_9 = arith.constant dense<0.000000e+00> : vector<16x384xf32>
    %18 = tpu.matmul %15, %17, %cst_9 {dimension_numbers = #tpu.dot_dimension_numbers<[1], [0], [0], [1], [0, 0, 1, 1], [], []>} : vector<16x128xbf16>, vector<128x384xbf16>, vector<16x384xf32> -> vector<16x384xf32>
    %c0_10 = arith.constant 0 : index
    %c0_11 = arith.constant 0 : index
    %c0_12 = arith.constant 0 : index
    %19 = vector.load %arg5[%c0_10, %c0_11, %c0_12] : memref<1x1x384xf32, #tpu.memory_space<vmem>>, vector<1x1x384xf32>
    %20 = vector.shape_cast %19 : vector<1x1x384xf32> to vector<1x384xf32>
    %21 = vector.broadcast %20 : vector<1x384xf32> to vector<16x384xf32>
    %22 = arith.addf %18, %21 : vector<16x384xf32>
    %23 = vector.extract_strided_slice %22 {offsets = [0, 0], sizes = [16, 128], strides = [1, 1]} : vector<16x384xf32> to vector<16x128xf32>
    %cst_13 = arith.constant 0.176776692 : f32
    %24 = vector.broadcast %cst_13 : f32 to vector<16x128xf32>
    %25 = arith.mulf %23, %24 : vector<16x128xf32>
    %26 = vector.extract_strided_slice %22 {offsets = [0, 128], sizes = [16, 128], strides = [1, 1]} : vector<16x384xf32> to vector<16x128xf32>
    %27 = vector.extract_strided_slice %22 {offsets = [0, 256], sizes = [16, 128], strides = [1, 1]} : vector<16x384xf32> to vector<16x128xf32>
    %28 = vector.extract_strided_slice %25 {offsets = [0, 0], sizes = [16, 32], strides = [1, 1]} : vector<16x128xf32> to vector<16x32xf32>
    %29 = arith.truncf %28 : vector<16x32xf32> to vector<16x32xbf16>
    %30 = vector.extract_strided_slice %26 {offsets = [0, 0], sizes = [16, 32], strides = [1, 1]} : vector<16x128xf32> to vector<16x32xf32>
    %31 = arith.truncf %30 : vector<16x32xf32> to vector<16x32xbf16>
    %32 = vector.extract_strided_slice %27 {offsets = [0, 0], sizes = [16, 32], strides = [1, 1]} : vector<16x128xf32> to vector<16x32xf32>
    %33 = arith.truncf %32 : vector<16x32xf32> to vector<16x32xbf16>
    %cst_14 = arith.constant dense<0.000000e+00> : vector<16x16xf32>
    %34 = tpu.matmul %29, %31, %cst_14 {dimension_numbers = #tpu.dot_dimension_numbers<[1], [1], [0], [0], [0, 0, 1, 0], [], []>} : vector<16x32xbf16>, vector<16x32xbf16>, vector<16x16xf32> -> vector<16x16xf32>
    %35 = arith.addf %34, %14 : vector<16x16xf32>
    %cst_15 = arith.constant dense<0xFF800000> : vector<16xf32>
    %36 = vector.multi_reduction <maximumf>, %35, %cst_15 [1] : vector<16x16xf32> to vector<16xf32>
    %37 = vector.shape_cast %36 : vector<16xf32> to vector<16x1xf32>
    %38 = vector.broadcast %37 : vector<16x1xf32> to vector<16x16xf32>
    %39 = arith.subf %35, %38 : vector<16x16xf32>
    %40 = math.exp %39 : vector<16x16xf32>
    %cst_16 = arith.constant dense<0.000000e+00> : vector<16xf32>
    %41 = vector.multi_reduction <add>, %40, %cst_16 [1] : vector<16x16xf32> to vector<16xf32>
    %42 = vector.shape_cast %41 : vector<16xf32> to vector<16x1xf32>
    %43 = tpu.reciprocal %42 {approx = true} : vector<16x1xf32> -> vector<16x1xf32>
    %44 = vector.broadcast %43 : vector<16x1xf32> to vector<16x16xf32>
    %45 = arith.mulf %40, %44 : vector<16x16xf32>
    %46 = arith.truncf %45 : vector<16x16xf32> to vector<16x16xbf16>
    %cst_17 = arith.constant dense<0.000000e+00> : vector<16x32xf32>
    %47 = tpu.matmul %46, %33, %cst_17 {dimension_numbers = #tpu.dot_dimension_numbers<[1], [0], [0], [1], [0, 0, 1, 1], [], []>} : vector<16x16xbf16>, vector<16x32xbf16>, vector<16x32xf32> -> vector<16x32xf32>
    %48 = vector.extract_strided_slice %25 {offsets = [0, 32], sizes = [16, 32], strides = [1, 1]} : vector<16x128xf32> to vector<16x32xf32>
    %49 = arith.truncf %48 : vector<16x32xf32> to vector<16x32xbf16>
    %50 = vector.extract_strided_slice %26 {offsets = [0, 32], sizes = [16, 32], strides = [1, 1]} : vector<16x128xf32> to vector<16x32xf32>
    %51 = arith.truncf %50 : vector<16x32xf32> to vector<16x32xbf16>
    %52 = vector.extract_strided_slice %27 {offsets = [0, 32], sizes = [16, 32], strides = [1, 1]} : vector<16x128xf32> to vector<16x32xf32>
    %53 = arith.truncf %52 : vector<16x32xf32> to vector<16x32xbf16>
    %cst_18 = arith.constant dense<0.000000e+00> : vector<16x16xf32>
    %54 = tpu.matmul %49, %51, %cst_18 {dimension_numbers = #tpu.dot_dimension_numbers<[1], [1], [0], [0], [0, 0, 1, 0], [], []>} : vector<16x32xbf16>, vector<16x32xbf16>, vector<16x16xf32> -> vector<16x16xf32>
    %55 = arith.addf %54, %14 : vector<16x16xf32>
    %cst_19 = arith.constant dense<0xFF800000> : vector<16xf32>
    %56 = vector.multi_reduction <maximumf>, %55, %cst_19 [1] : vector<16x16xf32> to vector<16xf32>
    %57 = vector.shape_cast %56 : vector<16xf32> to vector<16x1xf32>
    %58 = vector.broadcast %57 : vector<16x1xf32> to vector<16x16xf32>
    %59 = arith.subf %55, %58 : vector<16x16xf32>
    %60 = math.exp %59 : vector<16x16xf32>
    %cst_20 = arith.constant dense<0.000000e+00> : vector<16xf32>
    %61 = vector.multi_reduction <add>, %60, %cst_20 [1] : vector<16x16xf32> to vector<16xf32>
    %62 = vector.shape_cast %61 : vector<16xf32> to vector<16x1xf32>
    %63 = tpu.reciprocal %62 {approx = true} : vector<16x1xf32> -> vector<16x1xf32>
    %64 = vector.broadcast %63 : vector<16x1xf32> to vector<16x16xf32>
    %65 = arith.mulf %60, %64 : vector<16x16xf32>
    %66 = arith.truncf %65 : vector<16x16xf32> to vector<16x16xbf16>
    %cst_21 = arith.constant dense<0.000000e+00> : vector<16x32xf32>
    %67 = tpu.matmul %66, %53, %cst_21 {dimension_numbers = #tpu.dot_dimension_numbers<[1], [0], [0], [1], [0, 0, 1, 1], [], []>} : vector<16x16xbf16>, vector<16x32xbf16>, vector<16x32xf32> -> vector<16x32xf32>
    %68 = vector.extract_strided_slice %25 {offsets = [0, 64], sizes = [16, 32], strides = [1, 1]} : vector<16x128xf32> to vector<16x32xf32>
    %69 = arith.truncf %68 : vector<16x32xf32> to vector<16x32xbf16>
    %70 = vector.extract_strided_slice %26 {offsets = [0, 64], sizes = [16, 32], strides = [1, 1]} : vector<16x128xf32> to vector<16x32xf32>
    %71 = arith.truncf %70 : vector<16x32xf32> to vector<16x32xbf16>
    %72 = vector.extract_strided_slice %27 {offsets = [0, 64], sizes = [16, 32], strides = [1, 1]} : vector<16x128xf32> to vector<16x32xf32>
    %73 = arith.truncf %72 : vector<16x32xf32> to vector<16x32xbf16>
    %cst_22 = arith.constant dense<0.000000e+00> : vector<16x16xf32>
    %74 = tpu.matmul %69, %71, %cst_22 {dimension_numbers = #tpu.dot_dimension_numbers<[1], [1], [0], [0], [0, 0, 1, 0], [], []>} : vector<16x32xbf16>, vector<16x32xbf16>, vector<16x16xf32> -> vector<16x16xf32>
    %75 = arith.addf %74, %14 : vector<16x16xf32>
    %cst_23 = arith.constant dense<0xFF800000> : vector<16xf32>
    %76 = vector.multi_reduction <maximumf>, %75, %cst_23 [1] : vector<16x16xf32> to vector<16xf32>
    %77 = vector.shape_cast %76 : vector<16xf32> to vector<16x1xf32>
    %78 = vector.broadcast %77 : vector<16x1xf32> to vector<16x16xf32>
    %79 = arith.subf %75, %78 : vector<16x16xf32>
    %80 = math.exp %79 : vector<16x16xf32>
    %cst_24 = arith.constant dense<0.000000e+00> : vector<16xf32>
    %81 = vector.multi_reduction <add>, %80, %cst_24 [1] : vector<16x16xf32> to vector<16xf32>
    %82 = vector.shape_cast %81 : vector<16xf32> to vector<16x1xf32>
    %83 = tpu.reciprocal %82 {approx = true} : vector<16x1xf32> -> vector<16x1xf32>
    %84 = vector.broadcast %83 : vector<16x1xf32> to vector<16x16xf32>
    %85 = arith.mulf %80, %84 : vector<16x16xf32>
    %86 = arith.truncf %85 : vector<16x16xf32> to vector<16x16xbf16>
    %cst_25 = arith.constant dense<0.000000e+00> : vector<16x32xf32>
    %87 = tpu.matmul %86, %73, %cst_25 {dimension_numbers = #tpu.dot_dimension_numbers<[1], [0], [0], [1], [0, 0, 1, 1], [], []>} : vector<16x16xbf16>, vector<16x32xbf16>, vector<16x32xf32> -> vector<16x32xf32>
    %88 = vector.extract_strided_slice %25 {offsets = [0, 96], sizes = [16, 32], strides = [1, 1]} : vector<16x128xf32> to vector<16x32xf32>
    %89 = arith.truncf %88 : vector<16x32xf32> to vector<16x32xbf16>
    %90 = vector.extract_strided_slice %26 {offsets = [0, 96], sizes = [16, 32], strides = [1, 1]} : vector<16x128xf32> to vector<16x32xf32>
    %91 = arith.truncf %90 : vector<16x32xf32> to vector<16x32xbf16>
    %92 = vector.extract_strided_slice %27 {offsets = [0, 96], sizes = [16, 32], strides = [1, 1]} : vector<16x128xf32> to vector<16x32xf32>
    %93 = arith.truncf %92 : vector<16x32xf32> to vector<16x32xbf16>
    %cst_26 = arith.constant dense<0.000000e+00> : vector<16x16xf32>
    %94 = tpu.matmul %89, %91, %cst_26 {dimension_numbers = #tpu.dot_dimension_numbers<[1], [1], [0], [0], [0, 0, 1, 0], [], []>} : vector<16x32xbf16>, vector<16x32xbf16>, vector<16x16xf32> -> vector<16x16xf32>
    %95 = arith.addf %94, %14 : vector<16x16xf32>
    %cst_27 = arith.constant dense<0xFF800000> : vector<16xf32>
    %96 = vector.multi_reduction <maximumf>, %95, %cst_27 [1] : vector<16x16xf32> to vector<16xf32>
    %97 = vector.shape_cast %96 : vector<16xf32> to vector<16x1xf32>
    %98 = vector.broadcast %97 : vector<16x1xf32> to vector<16x16xf32>
    %99 = arith.subf %95, %98 : vector<16x16xf32>
    %100 = math.exp %99 : vector<16x16xf32>
    %cst_28 = arith.constant dense<0.000000e+00> : vector<16xf32>
    %101 = vector.multi_reduction <add>, %100, %cst_28 [1] : vector<16x16xf32> to vector<16xf32>
    %102 = vector.shape_cast %101 : vector<16xf32> to vector<16x1xf32>
    %103 = tpu.reciprocal %102 {approx = true} : vector<16x1xf32> -> vector<16x1xf32>
    %104 = vector.broadcast %103 : vector<16x1xf32> to vector<16x16xf32>
    %105 = arith.mulf %100, %104 : vector<16x16xf32>
    %106 = arith.truncf %105 : vector<16x16xf32> to vector<16x16xbf16>
    %cst_29 = arith.constant dense<0.000000e+00> : vector<16x32xf32>
    %107 = tpu.matmul %106, %93, %cst_29 {dimension_numbers = #tpu.dot_dimension_numbers<[1], [0], [0], [1], [0, 0, 1, 1], [], []>} : vector<16x16xbf16>, vector<16x32xbf16>, vector<16x32xf32> -> vector<16x32xf32>
    %108 = tpu.concatenate %47, %67, %87, %107 in 1 : vector<16x32xf32>, vector<16x32xf32>, vector<16x32xf32>, vector<16x32xf32> -> vector<16x128xf32>
    %109 = arith.truncf %108 : vector<16x128xf32> to vector<16x128xbf16>
    %c0_30 = arith.constant 0 : index
    %c0_31 = arith.constant 0 : index
    %c0_32 = arith.constant 0 : index
    %110 = vector.load %arg6[%c0_30, %c0_31, %c0_32] : memref<1x128x128xbf16, #tpu.memory_space<vmem>>, vector<1x128x128xbf16>
    %111 = vector.shape_cast %110 : vector<1x128x128xbf16> to vector<128x128xbf16>
    %cst_33 = arith.constant dense<0.000000e+00> : vector<16x128xf32>
    %112 = tpu.matmul %109, %111, %cst_33 {dimension_numbers = #tpu.dot_dimension_numbers<[1], [0], [0], [1], [0, 0, 1, 1], [], []>} : vector<16x128xbf16>, vector<128x128xbf16>, vector<16x128xf32> -> vector<16x128xf32>
    %c0_34 = arith.constant 0 : index
    %c0_35 = arith.constant 0 : index
    %c0_36 = arith.constant 0 : index
    %113 = vector.load %arg7[%c0_34, %c0_35, %c0_36] : memref<1x1x128xf32, #tpu.memory_space<vmem>>, vector<1x1x128xf32>
    %114 = vector.shape_cast %113 : vector<1x1x128xf32> to vector<1x128xf32>
    %115 = vector.broadcast %114 : vector<1x128xf32> to vector<16x128xf32>
    %116 = arith.addf %112, %115 : vector<16x128xf32>
    %c0_37 = arith.constant 0 : index
    %c0_38 = arith.constant 0 : index
    %117 = vector.load %arg12[%c0_37, %c0_38] : memref<1x128xf32, #tpu.memory_space<vmem>>, vector<1x128xf32>
    %c0_39 = arith.constant 0 : index
    %c0_40 = arith.constant 0 : index
    %118 = vector.load %arg13[%c0_39, %c0_40] : memref<1x128xf32, #tpu.memory_space<vmem>>, vector<1x128xf32>
    %119 = arith.addf %3, %116 : vector<16x128xf32>
    %cst_41 = arith.constant dense<0.000000e+00> : vector<16xf32>
    %120 = vector.multi_reduction <add>, %119, %cst_41 [1] : vector<16x128xf32> to vector<16xf32>
    %121 = vector.shape_cast %120 : vector<16xf32> to vector<16x1xf32>
    %cst_42 = arith.constant 1.280000e+02 : f32
    %122 = vector.broadcast %cst_42 : f32 to vector<16x1xf32>
    %123 = arith.divf %121, %122 : vector<16x1xf32>
    %124 = vector.broadcast %123 : vector<16x1xf32> to vector<16x128xf32>
    %125 = arith.subf %119, %124 : vector<16x128xf32>
    %126 = arith.mulf %125, %125 : vector<16x128xf32>
    %cst_43 = arith.constant dense<0.000000e+00> : vector<16xf32>
    %127 = vector.multi_reduction <add>, %126, %cst_43 [1] : vector<16x128xf32> to vector<16xf32>
    %128 = vector.shape_cast %127 : vector<16xf32> to vector<16x1xf32>
    %cst_44 = arith.constant 1.280000e+02 : f32
    %129 = vector.broadcast %cst_44 : f32 to vector<16x1xf32>
    %130 = arith.divf %128, %129 : vector<16x1xf32>
    %131 = vector.broadcast %123 : vector<16x1xf32> to vector<16x128xf32>
    %132 = arith.subf %119, %131 : vector<16x128xf32>
    %cst_45 = arith.constant 9.99999974E-6 : f32
    %133 = vector.broadcast %cst_45 : f32 to vector<16x1xf32>
    %134 = arith.addf %130, %133 : vector<16x1xf32>
    %135 = math.rsqrt %134 : vector<16x1xf32>
    %136 = vector.broadcast %135 : vector<16x1xf32> to vector<16x128xf32>
    %137 = arith.mulf %132, %136 : vector<16x128xf32>
    %138 = vector.broadcast %117 : vector<1x128xf32> to vector<16x128xf32>
    %139 = arith.mulf %137, %138 : vector<16x128xf32>
    %140 = vector.broadcast %118 : vector<1x128xf32> to vector<16x128xf32>
    %141 = arith.addf %139, %140 : vector<16x128xf32>
    %142 = arith.truncf %141 : vector<16x128xf32> to vector<16x128xbf16>
    %c0_46 = arith.constant 0 : index
    %c0_47 = arith.constant 0 : index
    %c0_48 = arith.constant 0 : index
    %143 = vector.load %arg8[%c0_46, %c0_47, %c0_48] : memref<1x128x256xbf16, #tpu.memory_space<vmem>>, vector<1x128x256xbf16>
    %144 = vector.shape_cast %143 : vector<1x128x256xbf16> to vector<128x256xbf16>
    %cst_49 = arith.constant dense<0.000000e+00> : vector<16x256xf32>
    %145 = tpu.matmul %142, %144, %cst_49 {dimension_numbers = #tpu.dot_dimension_numbers<[1], [0], [0], [1], [0, 0, 1, 1], [], []>} : vector<16x128xbf16>, vector<128x256xbf16>, vector<16x256xf32> -> vector<16x256xf32>
    %c0_50 = arith.constant 0 : index
    %c0_51 = arith.constant 0 : index
    %c0_52 = arith.constant 0 : index
    %146 = vector.load %arg9[%c0_50, %c0_51, %c0_52] : memref<1x1x256xf32, #tpu.memory_space<vmem>>, vector<1x1x256xf32>
    %147 = vector.shape_cast %146 : vector<1x1x256xf32> to vector<1x256xf32>
    %148 = vector.broadcast %147 : vector<1x256xf32> to vector<16x256xf32>
    %149 = arith.addf %145, %148 : vector<16x256xf32>
    %cst_53 = arith.constant 0.000000e+00 : f32
    %150 = vector.broadcast %cst_53 : f32 to vector<16x256xf32>
    %151 = arith.maximumf %149, %150 : vector<16x256xf32>
    %152 = arith.truncf %151 : vector<16x256xf32> to vector<16x256xbf16>
    %c0_54 = arith.constant 0 : index
    %c0_55 = arith.constant 0 : index
    %c0_56 = arith.constant 0 : index
    %153 = vector.load %arg10[%c0_54, %c0_55, %c0_56] : memref<1x256x128xbf16, #tpu.memory_space<vmem>>, vector<1x256x128xbf16>
    %154 = vector.shape_cast %153 : vector<1x256x128xbf16> to vector<256x128xbf16>
    %cst_57 = arith.constant dense<0.000000e+00> : vector<16x128xf32>
    %155 = tpu.matmul %152, %154, %cst_57 {dimension_numbers = #tpu.dot_dimension_numbers<[1], [0], [0], [1], [0, 0, 1, 1], [], []>} : vector<16x256xbf16>, vector<256x128xbf16>, vector<16x128xf32> -> vector<16x128xf32>
    %c0_58 = arith.constant 0 : index
    %c0_59 = arith.constant 0 : index
    %c0_60 = arith.constant 0 : index
    %156 = vector.load %arg11[%c0_58, %c0_59, %c0_60] : memref<1x1x128xf32, #tpu.memory_space<vmem>>, vector<1x1x128xf32>
    %157 = vector.shape_cast %156 : vector<1x1x128xf32> to vector<1x128xf32>
    %158 = vector.broadcast %157 : vector<1x128xf32> to vector<16x128xf32>
    %159 = arith.addf %155, %158 : vector<16x128xf32>
    %160 = arith.addf %159, %141 : vector<16x128xf32>
    %cst_61 = arith.constant dense<0.000000e+00> : vector<16xf32>
    %161 = vector.multi_reduction <add>, %160, %cst_61 [1] : vector<16x128xf32> to vector<16xf32>
    %162 = vector.shape_cast %161 : vector<16xf32> to vector<16x1xf32>
    %cst_62 = arith.constant 1.280000e+02 : f32
    %163 = vector.broadcast %cst_62 : f32 to vector<16x1xf32>
    %164 = arith.divf %162, %163 : vector<16x1xf32>
    %165 = vector.broadcast %164 : vector<16x1xf32> to vector<16x128xf32>
    %166 = arith.subf %160, %165 : vector<16x128xf32>
    %167 = arith.mulf %166, %166 : vector<16x128xf32>
    %cst_63 = arith.constant dense<0.000000e+00> : vector<16xf32>
    %168 = vector.multi_reduction <add>, %167, %cst_63 [1] : vector<16x128xf32> to vector<16xf32>
    %169 = vector.shape_cast %168 : vector<16xf32> to vector<16x1xf32>
    %cst_64 = arith.constant 1.280000e+02 : f32
    %170 = vector.broadcast %cst_64 : f32 to vector<16x1xf32>
    %171 = arith.divf %169, %170 : vector<16x1xf32>
    %172 = vector.broadcast %164 : vector<16x1xf32> to vector<16x128xf32>
    %173 = arith.subf %160, %172 : vector<16x128xf32>
    %cst_65 = arith.constant 9.99999974E-6 : f32
    %174 = vector.broadcast %cst_65 : f32 to vector<16x1xf32>
    %175 = arith.addf %171, %174 : vector<16x1xf32>
    %176 = math.rsqrt %175 : vector<16x1xf32>
    %177 = vector.broadcast %176 : vector<16x1xf32> to vector<16x128xf32>
    %178 = arith.mulf %173, %177 : vector<16x128xf32>
    %179 = vector.broadcast %117 : vector<1x128xf32> to vector<16x128xf32>
    %180 = arith.mulf %178, %179 : vector<16x128xf32>
    %181 = vector.broadcast %118 : vector<1x128xf32> to vector<16x128xf32>
    %182 = arith.addf %180, %181 : vector<16x128xf32>
    %c0_66 = arith.constant 0 : index
    %c0_67 = arith.constant 0 : index
    %183 = vector.load %arg15[%c0_66, %c0_67] : memref<16x128xf32, #tpu.memory_space<vmem>>, vector<16x128xf32>
    tpu.vector_store %arg15[%c0_66, %c0_67], %182 {strides = array<i32>} : memref<16x128xf32, #tpu.memory_space<vmem>>, vector<16x128xf32>,
    %c1_i32 = arith.constant 1 : i32
    %184 = arith.cmpi eq, %arg1, %c1_i32 : i32
    %185 = arith.extui %184 : i1 to i32
    %c0_i32_68 = arith.constant 0 : i32
    %186 = arith.cmpi ne, %185, %c0_i32_68 : i32
    scf.if %186 {
      %c0_69 = arith.constant 0 : index
      %c0_70 = arith.constant 0 : index
      %c0_71 = arith.constant 0 : index
      %187 = vector.load %arg14[%c0_69, %c0_70, %c0_71] : memref<1x16x128xf32, #tpu.memory_space<vmem>>, vector<1x16x128xf32>
      %188 = vector.shape_cast %187 : vector<1x16x128xf32> to vector<16x128xf32>
      %189 = vector.shape_cast %182 : vector<16x128xf32> to vector<1x16x128xf32>
      tpu.vector_store %arg14[%c0_69, %c0_70, %c0_71], %189 {strides = array<i32>} : memref<1x16x128xf32, #tpu.memory_space<vmem>>, vector<1x16x128xf32>,
    } else {
    }
    return
  }
  func.func @transform_0(%arg0: i32, %arg1: i32) -> (i32, i32, i32) {
    %c0_i32 = arith.constant 0 : i32
    %c0_i32_0 = arith.constant 0 : i32
    %c0_i32_1 = arith.constant 0 : i32
    return %arg0, %c0_i32, %c0_i32_0 : i32, i32, i32
  }
  func.func @transform_1(%arg0: i32, %arg1: i32) -> (i32, i32, i32) {
    %c0_i32 = arith.constant 0 : i32
    %c0_i32_0 = arith.constant 0 : i32
    %c0_i32_1 = arith.constant 0 : i32
    return %arg0, %c0_i32, %c0_i32_0 : i32, i32, i32
  }
  func.func @transform_2(%arg0: i32, %arg1: i32) -> (i32, i32, i32) {
    %c0_i32 = arith.constant 0 : i32
    %c0_i32_0 = arith.constant 0 : i32
    %c0_i32_1 = arith.constant 0 : i32
    return %arg1, %c0_i32, %c0_i32_0 : i32, i32, i32
  }
  func.func @transform_3(%arg0: i32, %arg1: i32) -> (i32, i32, i32) {
    %c0_i32 = arith.constant 0 : i32
    %c0_i32_0 = arith.constant 0 : i32
    %c0_i32_1 = arith.constant 0 : i32
    return %arg1, %c0_i32, %c0_i32_0 : i32, i32, i32
  }
  func.func @transform_4(%arg0: i32, %arg1: i32) -> (i32, i32, i32) {
    %c0_i32 = arith.constant 0 : i32
    %c0_i32_0 = arith.constant 0 : i32
    %c0_i32_1 = arith.constant 0 : i32
    return %arg1, %c0_i32, %c0_i32_0 : i32, i32, i32
  }
  func.func @transform_5(%arg0: i32, %arg1: i32) -> (i32, i32, i32) {
    %c0_i32 = arith.constant 0 : i32
    %c0_i32_0 = arith.constant 0 : i32
    %c0_i32_1 = arith.constant 0 : i32
    return %arg1, %c0_i32, %c0_i32_0 : i32, i32, i32
  }
  func.func @transform_6(%arg0: i32, %arg1: i32) -> (i32, i32, i32) {
    %c0_i32 = arith.constant 0 : i32
    %c0_i32_0 = arith.constant 0 : i32
    %c0_i32_1 = arith.constant 0 : i32
    return %arg1, %c0_i32, %c0_i32_0 : i32, i32, i32
  }
  func.func @transform_7(%arg0: i32, %arg1: i32) -> (i32, i32, i32) {
    %c0_i32 = arith.constant 0 : i32
    %c0_i32_0 = arith.constant 0 : i32
    %c0_i32_1 = arith.constant 0 : i32
    return %arg1, %c0_i32, %c0_i32_0 : i32, i32, i32
  }
  func.func @transform_8(%arg0: i32, %arg1: i32) -> (i32, i32, i32) {
    %c0_i32 = arith.constant 0 : i32
    %c0_i32_0 = arith.constant 0 : i32
    %c0_i32_1 = arith.constant 0 : i32
    return %arg1, %c0_i32, %c0_i32_0 : i32, i32, i32
  }
  func.func @transform_9(%arg0: i32, %arg1: i32) -> (i32, i32, i32) {
    %c0_i32 = arith.constant 0 : i32
    %c0_i32_0 = arith.constant 0 : i32
    %c0_i32_1 = arith.constant 0 : i32
    return %arg1, %c0_i32, %c0_i32_0 : i32, i32, i32
  }
  func.func @transform_10(%arg0: i32, %arg1: i32) -> (i32, i32) {
    %c0_i32 = arith.constant 0 : i32
    %c0_i32_0 = arith.constant 0 : i32
    %c0_i32_1 = arith.constant 0 : i32
    return %c0_i32, %c0_i32_0 : i32, i32
  }
  func.func @transform_11(%arg0: i32, %arg1: i32) -> (i32, i32) {
    %c0_i32 = arith.constant 0 : i32
    %c0_i32_0 = arith.constant 0 : i32
    %c0_i32_1 = arith.constant 0 : i32
    return %c0_i32, %c0_i32_0 : i32, i32
  }
  func.func @transform_12(%arg0: i32, %arg1: i32) -> (i32, i32, i32) {
    %c0_i32 = arith.constant 0 : i32
    %c0_i32_0 = arith.constant 0 : i32
    %c0_i32_1 = arith.constant 0 : i32
    return %arg0, %c0_i32, %c0_i32_0 : i32, i32, i32
  }
}

</mosaic_0001>

<llo_original>
// kernel: tpu_custom_call.1
$region0: #{tpu_custom_call.1}
  #allocation0 [shape = 'u32[]', space=smem, size = 0x4, offset = 0x4, fixed_abs, tag = 'smem constant byte address 0x4 - core index']
  #allocation1 [shape = 'u32[144,128]{1,0:T(1,128)}', space=vmem, size = 0x12000, scoped, tag = 'internal scratch']
  #allocation2 [shape = 'f32[16,128]{1,0:T(8,128)}', space=vmem, size = 0x2000, scoped, tag = 'scratch operand']
  %s0 = inlined_call_operand.hbm [shape: f32[2,16,128], index: 0, kind: input, shape index: {}]
  %s1 = inlined_call_operand.hbm [shape: f32[2,1,16], index: 1, kind: input, shape index: {}]
  %s2 = inlined_call_operand.hbm [shape: bf16[2,128,384], index: 2, kind: input, shape index: {}]
  %s3 = inlined_call_operand.vmem [shape: f32[2,1,384], index: 3, kind: input, shape index: {}]
  %s4 = inlined_call_operand.hbm [shape: bf16[2,128,128], index: 4, kind: input, shape index: {}]
  %s5 = inlined_call_operand.vmem [shape: f32[2,1,128], index: 5, kind: input, shape index: {}]
  %s6 = inlined_call_operand.hbm [shape: bf16[2,128,256], index: 6, kind: input, shape index: {}]
  %s7 = inlined_call_operand.vmem [shape: f32[2,1,256], index: 7, kind: input, shape index: {}]
  %s8 = inlined_call_operand.hbm [shape: bf16[2,256,128], index: 8, kind: input, shape index: {}]
  %s9 = inlined_call_operand.vmem [shape: f32[2,1,128], index: 9, kind: input, shape index: {}]
  %s10 = inlined_call_operand.vmem [shape: f32[1,128], index: 10, kind: input, shape index: {}]
  %s11 = inlined_call_operand.vmem [shape: f32[1,128], index: 11, kind: input, shape index: {}]
  %s12 = inlined_call_operand.hbm [shape: f32[2,16,128], index: 12, kind: output, shape index: {}]
  %s13 = sld [smem:[#allocation0]]
  $region113: #{tpu_custom_call.1} parent=0
    _
  %s15 = ssub.s32 1, %s13
  %s16 = scalar_select 0, %s15, %s13
  $region1: #{tpu_custom_call.1} parent=0
    #allocation3 [shape = 'u8[16384]{0}', space=vmem, size = 0x4000, scoped, tag = 'input window, operand 0']
    #allocation4 [shape = 's32[2]{0}', space=sflag, size = 0x8, scoped, tag = 'scoped memory for tpu_custom_call.1']
    #allocation5 [shape = 's32[2]{0}', space=sflag, size = 0x8, scoped, tag = 'scoped memory for tpu_custom_call.1']
    #allocation6 [shape = 'u8[1024]{0}', space=vmem, size = 0x400, scoped, tag = 'input window, operand 1']
    #allocation7 [shape = 's32[2]{0}', space=sflag, size = 0x8, scoped, tag = 'scoped memory for tpu_custom_call.1']
    #allocation8 [shape = 'u8[196608]{0}', space=vmem, size = 0x30000, scoped, tag = 'input window, operand 2']
    #allocation9 [shape = 'u8[65536]{0}', space=vmem, size = 0x10000, scoped, tag = 'input window, operand 4']
    #allocation10 [shape = 's32[2]{0}', space=sflag, size = 0x8, scoped, tag = 'scoped memory for tpu_custom_call.1']
    #allocation11 [shape = 'u8[131072]{0}', space=vmem, size = 0x20000, scoped, tag = 'input window, operand 6']
    #allocation12 [shape = 'u8[131072]{0}', space=vmem, size = 0x20000, scoped, tag = 'input window, operand 8']
    #allocation13 [shape = 's32[2]{0}', space=sflag, size = 0x8, scoped, tag = 'scoped memory for tpu_custom_call.1']
    #allocation14 [shape = 'u8[16384]{0}', space=vmem, size = 0x4000, scoped, tag = 'output window, operand 0']
    %17 = vsyncpa [#allocation4], 0
    %s18 = scalar_lea.sflag [#allocation4], 1
    %19 = vsyncpa %s18, 0
    %20 = vsyncpa [#allocation7], 0
    %s21 = scalar_lea.sflag [#allocation7], 1
    %22 = vsyncpa %s21, 0
    %23 = vsyncpa [#allocation10], 0
    %s24 = scalar_lea.sflag [#allocation10], 1
    %25 = vsyncpa %s24, 0
    %26 = vsyncpa [#allocation13], 0
    %s27 = scalar_lea.sflag [#allocation13], 1
    %28 = vsyncpa %s27, 0
    %29 = vsyncpa [#allocation5], 0
    %s30 = scalar_lea.sflag [#allocation5], 1
    %31 = vsyncpa %s30, 0
    loop: start=0, step=1, limit=6
    $region2: #{tpu_custom_call.1} parent=1 // loop_pre_header
      _
    $region3: #{tpu_custom_call.1} parent=1 // loop_header
      %s33 = sphi 0, %s37
      %p34 = scmp.ge.s32.totalorder %s33, 6
      %s40 = sphi 0, %s52
      %s41 = sphi 0, %s48
      %s42 = sphi 0, %s40
      %s43 = sphi 0, %s41
      %s44 = sphi 0, %s42
      %s45 = sphi 0, %s43
      %s55 = sphi 0, %s57
      %s58 = sphi 0, %s55
      %s59 = sphi 0, %s58
      %s75 = sphi 0, %s59
      %s81 = sphi 0, %s83
      %s84 = sphi 0, %s81
      %s85 = sphi 0, %s84
      %s101 = sphi 0, %s85
      %s107 = sphi 0, %s109
      %s110 = sphi 0, %s107
      %s111 = sphi 0, %s110
      %s127 = sphi 0, %s111
      %s133 = sphi 0, %s135
      %s136 = sphi 0, %s133
      %s137 = sphi 0, %s136
      %s153 = sphi 0, %s137
      %s159 = sphi 0, %s161
      %s162 = sphi 0, %s159
      %s163 = sphi 0, %s162
      %s179 = sphi 0, %s163
      %s185 = sphi 0, %s187
      %s188 = sphi 0, %s185
      %s189 = sphi 0, %s188
      %s205 = sphi 0, %s189
      %s211 = sphi 0, %s213
      %s214 = sphi 0, %s211
      %s215 = sphi 0, %s214
      %s231 = sphi 0, %s215
      %s237 = sphi 0, %s239
      %s240 = sphi 0, %s237
      %s241 = sphi 0, %s240
      %s257 = sphi 0, %s241
      %s263 = sphi 0, %s265
      %s266 = sphi 0, %s263
      %s267 = sphi 0, %s266
      %s283 = sphi 0, %s267
      %s289 = sphi 0, %s291
      %s292 = sphi 0, %s289
      %s293 = sphi 0, %s292
      %s309 = sphi 0, %s293
      %s313 = sphi 0, %s313
      %s315 = sphi 0, %s313
      %s316 = sphi 0, %s315
      %s330 = sphi 0, %s316
      %s334 = sphi 0, %s334
      %s336 = sphi 0, %s334
      %s337 = sphi 0, %s336
      %s351 = sphi 0, %s337
      %s357 = sphi 0, %s359
      %s360 = sphi 0, %s357
      %s361 = sphi 0, %s360
      %s377 = sphi 0, %s361
    $region4: #{tpu_custom_call.1} parent=1 // loop_header_branch
      %36 = sbr.rel (%p34) target = $region8
    $region5: #{tpu_custom_call.1} parent=1 // loop_body
      %s38 = ssub.s32 %s33, 1
      %s39 = ssub.s32 %s33, 2
      %s46 = sadd.s32 1, %s41
      %p47 = scmp.ge.s32.totalorder %s46, 2
      %s48 = scalar_select %p47, 0, %s46
      %s49 = sadd.s32 1, %s40
      %s50 = scalar_select %p47, %s49, %s40
      %p51 = scmp.ge.s32.totalorder %s50, 2
      %s52 = scalar_select %p51, 0, %s50
      %s53 = ssub.s32 %s40, %s52
      %p54 = scmp.eq.s32.totalorder %s53, 0
      %s56 = sadd.s32 %s55, 1
      %s57 = scalar_select %p54, %s55, %s56
      %p60 = pneg %p54
      %p61 = scmp.eq.s32.totalorder %s33, 3
      %p62 = por %p60, %p61
      %p63 = scmp.ne.s32.totalorder %s55, %s58
      %p64 = scmp.eq.s32.totalorder %s33, 0
      %p65 = por %p63, %p64
      %p66 = scmp.ne.s32.totalorder %s55, %s58
      %p67 = scmp.eq.s32.totalorder %s38, 3
      %p68 = por %p66, %p67
      %p69 = scmp.ne.s32.totalorder %s58, %s59
      %p70 = scmp.eq.s32.totalorder %s38, 0
      %p71 = por %p69, %p70
      %p72 = scmp.ne.s32.totalorder %s58, %s59
      %p73 = scmp.eq.s32.totalorder %s39, 3
      %p74 = por %p72, %p73
      %p76 = scmp.ne.s32.totalorder %s59, %s75
      %p77 = scmp.eq.s32.totalorder %s39, 0
      %p78 = por %p76, %p77
      %s79 = ssub.s32 %s40, %s52
      %p80 = scmp.eq.s32.totalorder %s79, 0
      %s82 = sadd.s32 %s81, 1
      %s83 = scalar_select %p80, %s81, %s82
      %p86 = pneg %p80
      %p87 = scmp.eq.s32.totalorder %s33, 3
      %p88 = por %p86, %p87
      %p89 = scmp.ne.s32.totalorder %s81, %s84
      %p90 = scmp.eq.s32.totalorder %s33, 0
      %p91 = por %p89, %p90
      %p92 = scmp.ne.s32.totalorder %s81, %s84
      %p93 = scmp.eq.s32.totalorder %s38, 3
      %p94 = por %p92, %p93
      %p95 = scmp.ne.s32.totalorder %s84, %s85
      %p96 = scmp.eq.s32.totalorder %s38, 0
      %p97 = por %p95, %p96
      %p98 = scmp.ne.s32.totalorder %s84, %s85
      %p99 = scmp.eq.s32.totalorder %s39, 3
      %p100 = por %p98, %p99
      %p102 = scmp.ne.s32.totalorder %s85, %s101
      %p103 = scmp.eq.s32.totalorder %s39, 0
      %p104 = por %p102, %p103
      %s105 = ssub.s32 %s41, %s48
      %p106 = scmp.eq.s32.totalorder %s105, 0
      %s108 = sadd.s32 %s107, 1
      %s109 = scalar_select %p106, %s107, %s108
      %p112 = pneg %p106
      %p113 = scmp.eq.s32.totalorder %s33, 3
      %p114 = por %p112, %p113
      %p115 = scmp.ne.s32.totalorder %s107, %s110
      %p116 = scmp.eq.s32.totalorder %s33, 0
      %p117 = por %p115, %p116
      %p118 = scmp.ne.s32.totalorder %s107, %s110
      %p119 = scmp.eq.s32.totalorder %s38, 3
      %p120 = por %p118, %p119
      %p121 = scmp.ne.s32.totalorder %s110, %s111
      %p122 = scmp.eq.s32.totalorder %s38, 0
      %p123 = por %p121, %p122
      %p124 = scmp.ne.s32.totalorder %s110, %s111
      %p125 = scmp.eq.s32.totalorder %s39, 3
      %p126 = por %p124, %p125
      %p128 = scmp.ne.s32.totalorder %s111, %s127
      %p129 = scmp.eq.s32.totalorder %s39, 0
      %p130 = por %p128, %p129
      %s131 = ssub.s32 %s41, %s48
      %p132 = scmp.eq.s32.totalorder %s131, 0
      %s134 = sadd.s32 %s133, 1
      %s135 = scalar_select %p132, %s133, %s134
      %p138 = pneg %p132
      %p139 = scmp.eq.s32.totalorder %s33, 3
      %p140 = por %p138, %p139
      %p141 = scmp.ne.s32.totalorder %s133, %s136
      %p142 = scmp.eq.s32.totalorder %s33, 0
      %p143 = por %p141, %p142
      %p144 = scmp.ne.s32.totalorder %s133, %s136
      %p145 = scmp.eq.s32.totalorder %s38, 3
      %p146 = por %p144, %p145
      %p147 = scmp.ne.s32.totalorder %s136, %s137
      %p148 = scmp.eq.s32.totalorder %s38, 0
      %p149 = por %p147, %p148
      %p150 = scmp.ne.s32.totalorder %s136, %s137
      %p151 = scmp.eq.s32.totalorder %s39, 3
      %p152 = por %p150, %p151
      %p154 = scmp.ne.s32.totalorder %s137, %s153
      %p155 = scmp.eq.s32.totalorder %s39, 0
      %p156 = por %p154, %p155
      %s157 = ssub.s32 %s41, %s48
      %p158 = scmp.eq.s32.totalorder %s157, 0
      %s160 = sadd.s32 %s159, 1
      %s161 = scalar_select %p158, %s159, %s160
      %p164 = pneg %p158
      %p165 = scmp.eq.s32.totalorder %s33, 3
      %p166 = por %p164, %p165
      %p167 = scmp.ne.s32.totalorder %s159, %s162
      %p168 = scmp.eq.s32.totalorder %s33, 0
      %p169 = por %p167, %p168
      %p170 = scmp.ne.s32.totalorder %s159, %s162
      %p171 = scmp.eq.s32.totalorder %s38, 3
      %p172 = por %p170, %p171
      %p173 = scmp.ne.s32.totalorder %s162, %s163
      %p174 = scmp.eq.s32.totalorder %s38, 0
      %p175 = por %p173, %p174
      %p176 = scmp.ne.s32.totalorder %s162, %s163
      %p177 = scmp.eq.s32.totalorder %s39, 3
      %p178 = por %p176, %p177
      %p180 = scmp.ne.s32.totalorder %s163, %s179
      %p181 = scmp.eq.s32.totalorder %s39, 0
      %p182 = por %p180, %p181
      %s183 = ssub.s32 %s41, %s48
      %p184 = scmp.eq.s32.totalorder %s183, 0
      %s186 = sadd.s32 %s185, 1
      %s187 = scalar_select %p184, %s185, %s186
      %p190 = pneg %p184
      %p191 = scmp.eq.s32.totalorder %s33, 3
      %p192 = por %p190, %p191
      %p193 = scmp.ne.s32.totalorder %s185, %s188
      %p194 = scmp.eq.s32.totalorder %s33, 0
      %p195 = por %p193, %p194
      %p196 = scmp.ne.s32.totalorder %s185, %s188
      %p197 = scmp.eq.s32.totalorder %s38, 3
      %p198 = por %p196, %p197
      %p199 = scmp.ne.s32.totalorder %s188, %s189
      %p200 = scmp.eq.s32.totalorder %s38, 0
      %p201 = por %p199, %p200
      %p202 = scmp.ne.s32.totalorder %s188, %s189
      %p203 = scmp.eq.s32.totalorder %s39, 3
      %p204 = por %p202, %p203
      %p206 = scmp.ne.s32.totalorder %s189, %s205
      %p207 = scmp.eq.s32.totalorder %s39, 0
      %p208 = por %p206, %p207
      %s209 = ssub.s32 %s41, %s48
      %p210 = scmp.eq.s32.totalorder %s209, 0
      %s212 = sadd.s32 %s211, 1
      %s213 = scalar_select %p210, %s211, %s212
      %p216 = pneg %p210
      %p217 = scmp.eq.s32.totalorder %s33, 3
      %p218 = por %p216, %p217
      %p219 = scmp.ne.s32.totalorder %s211, %s214
      %p220 = scmp.eq.s32.totalorder %s33, 0
      %p221 = por %p219, %p220
      %p222 = scmp.ne.s32.totalorder %s211, %s214
      %p223 = scmp.eq.s32.totalorder %s38, 3
      %p224 = por %p222, %p223
      %p225 = scmp.ne.s32.totalorder %s214, %s215
      %p226 = scmp.eq.s32.totalorder %s38, 0
      %p227 = por %p225, %p226
      %p228 = scmp.ne.s32.totalorder %s214, %s215
      %p229 = scmp.eq.s32.totalorder %s39, 3
      %p230 = por %p228, %p229
      %p232 = scmp.ne.s32.totalorder %s215, %s231
      %p233 = scmp.eq.s32.totalorder %s39, 0
      %p234 = por %p232, %p233
      %s235 = ssub.s32 %s41, %s48
      %p236 = scmp.eq.s32.totalorder %s235, 0
      %s238 = sadd.s32 %s237, 1
      %s239 = scalar_select %p236, %s237, %s238
      %p242 = pneg %p236
      %p243 = scmp.eq.s32.totalorder %s33, 3
      %p244 = por %p242, %p243
      %p245 = scmp.ne.s32.totalorder %s237, %s240
      %p246 = scmp.eq.s32.totalorder %s33, 0
      %p247 = por %p245, %p246
      %p248 = scmp.ne.s32.totalorder %s237, %s240
      %p249 = scmp.eq.s32.totalorder %s38, 3
      %p250 = por %p248, %p249
      %p251 = scmp.ne.s32.totalorder %s240, %s241
      %p252 = scmp.eq.s32.totalorder %s38, 0
      %p253 = por %p251, %p252
      %p254 = scmp.ne.s32.totalorder %s240, %s241
      %p255 = scmp.eq.s32.totalorder %s39, 3
      %p256 = por %p254, %p255
      %p258 = scmp.ne.s32.totalorder %s241, %s257
      %p259 = scmp.eq.s32.totalorder %s39, 0
      %p260 = por %p258, %p259
      %s261 = ssub.s32 %s41, %s48
      %p262 = scmp.eq.s32.totalorder %s261, 0
      %s264 = sadd.s32 %s263, 1
      %s265 = scalar_select %p262, %s263, %s264
      %p268 = pneg %p262
      %p269 = scmp.eq.s32.totalorder %s33, 3
      %p270 = por %p268, %p269
      %p271 = scmp.ne.s32.totalorder %s263, %s266
      %p272 = scmp.eq.s32.totalorder %s33, 0
      %p273 = por %p271, %p272
      %p274 = scmp.ne.s32.totalorder %s263, %s266
      %p275 = scmp.eq.s32.totalorder %s38, 3
      %p276 = por %p274, %p275
      %p277 = scmp.ne.s32.totalorder %s266, %s267
      %p278 = scmp.eq.s32.totalorder %s38, 0
      %p279 = por %p277, %p278
      %p280 = scmp.ne.s32.totalorder %s266, %s267
      %p281 = scmp.eq.s32.totalorder %s39, 3
      %p282 = por %p280, %p281
      %p284 = scmp.ne.s32.totalorder %s267, %s283
      %p285 = scmp.eq.s32.totalorder %s39, 0
      %p286 = por %p284, %p285
      %s287 = ssub.s32 %s41, %s48
      %p288 = scmp.eq.s32.totalorder %s287, 0
      %s290 = sadd.s32 %s289, 1
      %s291 = scalar_select %p288, %s289, %s290
      %p294 = pneg %p288
      %p295 = scmp.eq.s32.totalorder %s33, 3
      %p296 = por %p294, %p295
      %p297 = scmp.ne.s32.totalorder %s289, %s292
      %p298 = scmp.eq.s32.totalorder %s33, 0
      %p299 = por %p297, %p298
      %p300 = scmp.ne.s32.totalorder %s289, %s292
      %p301 = scmp.eq.s32.totalorder %s38, 3
      %p302 = por %p300, %p301
      %p303 = scmp.ne.s32.totalorder %s292, %s293
      %p304 = scmp.eq.s32.totalorder %s38, 0
      %p305 = por %p303, %p304
      %p306 = scmp.ne.s32.totalorder %s292, %s293
      %p307 = scmp.eq.s32.totalorder %s39, 3
      %p308 = por %p306, %p307
      %p310 = scmp.ne.s32.totalorder %s293, %s309
      %p311 = scmp.eq.s32.totalorder %s39, 0
      %p312 = por %p310, %p311
      %s314 = sadd.s32 %s313, 1
      %p317 = scmp.eq.s32.totalorder %s33, 3
      %p318 = scmp.ne.s32.totalorder %s313, %s315
      %p319 = scmp.eq.s32.totalorder %s33, 0
      %p320 = por %p318, %p319
      %p321 = scmp.ne.s32.totalorder %s313, %s315
      %p322 = scmp.eq.s32.totalorder %s38, 3
      %p323 = por %p321, %p322
      %p324 = scmp.ne.s32.totalorder %s315, %s316
      %p325 = scmp.eq.s32.totalorder %s38, 0
      %p326 = por %p324, %p325
      %p327 = scmp.ne.s32.totalorder %s315, %s316
      %p328 = scmp.eq.s32.totalorder %s39, 3
      %p329 = por %p327, %p328
      %p331 = scmp.ne.s32.totalorder %s316, %s330
      %p332 = scmp.eq.s32.totalorder %s39, 0
      %p333 = por %p331, %p332
      %s335 = sadd.s32 %s334, 1
      %p338 = scmp.eq.s32.totalorder %s33, 3
      %p339 = scmp.ne.s32.totalorder %s334, %s336
      %p340 = scmp.eq.s32.totalorder %s33, 0
      %p341 = por %p339, %p340
      %p342 = scmp.ne.s32.totalorder %s334, %s336
      %p343 = scmp.eq.s32.totalorder %s38, 3
      %p344 = por %p342, %p343
      %p345 = scmp.ne.s32.totalorder %s336, %s337
      %p346 = scmp.eq.s32.totalorder %s38, 0
      %p347 = por %p345, %p346
      %p348 = scmp.ne.s32.totalorder %s336, %s337
      %p349 = scmp.eq.s32.totalorder %s39, 3
      %p350 = por %p348, %p349
      %p352 = scmp.ne.s32.totalorder %s337, %s351
      %p353 = scmp.eq.s32.totalorder %s39, 0
      %p354 = por %p352, %p353
      %s355 = ssub.s32 %s40, %s52
      %p356 = scmp.eq.s32.totalorder %s355, 0
      %s358 = sadd.s32 %s357, 1
      %s359 = scalar_select %p356, %s357, %s358
      %p362 = pneg %p356
      %p363 = scmp.eq.s32.totalorder %s33, 3
      %p364 = por %p362, %p363
      %p365 = scmp.ne.s32.totalorder %s357, %s360
      %p366 = scmp.eq.s32.totalorder %s33, 0
      %p367 = por %p365, %p366
      %p368 = scmp.ne.s32.totalorder %s357, %s360
      %p369 = scmp.eq.s32.totalorder %s38, 3
      %p370 = por %p368, %p369
      %p371 = scmp.ne.s32.totalorder %s360, %s361
      %p372 = scmp.eq.s32.totalorder %s38, 0
      %p373 = por %p371, %p372
      %p374 = scmp.ne.s32.totalorder %s360, %s361
      %p375 = scmp.eq.s32.totalorder %s39, 3
      %p376 = por %p374, %p375
      %p378 = scmp.ne.s32.totalorder %s361, %s377
      %p379 = scmp.eq.s32.totalorder %s39, 0
      %p380 = por %p378, %p379
      %p381 = scmp.le.s32.totalorder 1, %s33
      %p382 = scmp.lt.s32.totalorder %s33, 5
      %p383 = pnand %p381, %p382
      %p384 = pneg %p383
      // Predicated region
      $region9: #{tpu_custom_call.1} parent=5 // pred_check
        _
      $region10: #{tpu_custom_call.1} parent=5 // pred_check_branch
        %386 = sbr.rel (%p383) target = $region12
      $region11: #{tpu_custom_call.1} parent=5 // pred_region
        %s387 = ssub.s32 %s33, 1
        // Predicated region
        $region13: #{tpu_custom_call.1} parent=11 // pred_check
          %p388 = pneg %p326
        $region14: #{tpu_custom_call.1} parent=11 // pred_check_branch
          %390 = sbr.rel (%p388) target = $region16
        $region15: #{tpu_custom_call.1} parent=11 // pred_region
          _
        $region16: #{tpu_custom_call.1} parent=11 // pred_fallthru
          _
        // Predicated region
        $region17: #{tpu_custom_call.1} parent=11 // pred_check
          %p391 = pneg %p347
        $region18: #{tpu_custom_call.1} parent=11 // pred_check_branch
          %393 = sbr.rel (%p391) target = $region20
        $region19: #{tpu_custom_call.1} parent=11 // pred_region
          _
        $region20: #{tpu_custom_call.1} parent=11 // pred_fallthru
          _
      $region12: #{tpu_custom_call.1} parent=5 // pred_fallthru
        _
      %p394 = scmp.lt.s32.totalorder %s33, 4
      // Predicated region
      $region21: #{tpu_custom_call.1} parent=5 // pred_check
        %p395 = pneg %p394
      $region22: #{tpu_custom_call.1} parent=5 // pred_check_branch
        %397 = sbr.rel (%p395) target = $region24
      $region23: #{tpu_custom_call.1} parent=5 // pred_region
        // Predicated region
        $region25: #{tpu_custom_call.1} parent=23 // pred_check
          %p398 = pneg %p65
        $region26: #{tpu_custom_call.1} parent=23 // pred_check_branch
          %400 = sbr.rel (%p398) target = $region28
        $region27: #{tpu_custom_call.1} parent=23 // pred_region
          %s401 = sand.u32 %s55, 1
          %s402 = scalar_lea.sflag [#allocation4], %s401
          %s403 = sand.u32 %s55, 1
          %s404 = smul.addr %s403, 16
          %s405 = scalar_lea.vmem [#allocation3], %s404
          %s407 = ssub.s32 256, 256
          %408 = vsyncadd %s402, %s407
          %s409 = smul.addr %s40, 2
          %s410 = smul.addr %s409, 128
          %s411 = scalar_lea.hbm %s0, %s410
          %s412 = sshll.u32 %s405, 4
          %s413 = int_to_ptr.vmem [resolvable:$true] %s412
          %418 = dma.hbm_to_vmem [thread:$0]  %s411, 256, %s413, %s402, 128, 128, 8
        $region28: #{tpu_custom_call.1} parent=23 // pred_fallthru
          _
        // Predicated region
        $region29: #{tpu_custom_call.1} parent=23 // pred_check
          %p419 = pneg %p91
        $region30: #{tpu_custom_call.1} parent=23 // pred_check_branch
          %421 = sbr.rel (%p419) target = $region32
        $region31: #{tpu_custom_call.1} parent=23 // pred_region
          %s422 = sand.u32 %s33, 1
          %s423 = scalar_lea.sflag [#allocation7], %s422
          %s424 = sand.u32 %s81, 1
          %s425 = scalar_lea.vmem [#allocation6], %s424
          %s427 = ssub.s32 16, 16
          %428 = vsyncadd %s423, %s427
          %s429 = smul.addr %s40, 16
          %s430 = scalar_lea.hbm %s1, %s429
          %s432 = sshll.u32 %s425, 4
          %s433 = int_to_ptr.vmem [resolvable:$true] %s432
          %435 = dma.hbm_to_vmem [thread:$0]  %s430, 16, %s433, %s423
        $region32: #{tpu_custom_call.1} parent=23 // pred_fallthru
          _
        // Predicated region
        $region33: #{tpu_custom_call.1} parent=23 // pred_check
          %p436 = pneg %p117
        $region34: #{tpu_custom_call.1} parent=23 // pred_check_branch
          %438 = sbr.rel (%p436) target = $region36
        $region35: #{tpu_custom_call.1} parent=23 // pred_region
          %s439 = sand.u32 %s33, 1
          %s440 = scalar_lea.sflag [#allocation7], %s439
          %s441 = sand.u32 %s107, 1
          %s442 = smul.addr %s441, 192
          %s443 = scalar_lea.vmem [#allocation8], %s442
          %s445 = ssub.s32 3072, 3072
          %446 = vsyncadd %s440, %s445
          %s447 = smul.addr %s41, 48
          %s448 = smul.addr %s447, 64
          %s449 = scalar_lea.hbm %s2, %s448
          %s450 = sshll.u32 %s443, 4
          %s451 = int_to_ptr.vmem [resolvable:$true] %s450
          %456 = dma.hbm_to_vmem [thread:$0]  %s449, 3072, %s451, %s440, 192, 192, 12
        $region36: #{tpu_custom_call.1} parent=23 // pred_fallthru
          _
        // Predicated region
        $region37: #{tpu_custom_call.1} parent=23 // pred_check
          %p457 = pneg %p143
        $region38: #{tpu_custom_call.1} parent=23 // pred_check_branch
          %459 = sbr.rel (%p457) target = $region40
        $region39: #{tpu_custom_call.1} parent=23 // pred_region
          %p460 = scmp.lt.s32.totalorder %s41, 1
          %s461 = scalar_select %p460, %s41, 1
          %s462 = smul.addr %s461, 3
          %s463 = scalar_lea.vmem %s3, %s462
        $region40: #{tpu_custom_call.1} parent=23 // pred_fallthru
          _
        // Predicated region
        $region41: #{tpu_custom_call.1} parent=23 // pred_check
          %p464 = pneg %p169
        $region42: #{tpu_custom_call.1} parent=23 // pred_check_branch
          %466 = sbr.rel (%p464) target = $region44
        $region43: #{tpu_custom_call.1} parent=23 // pred_region
          %s467 = sand.u32 %s33, 1
          %s468 = scalar_lea.sflag [#allocation10], %s467
          %s469 = sand.u32 %s159, 1
          %s470 = smul.addr %s469, 64
          %s471 = scalar_lea.vmem [#allocation9], %s470
          %s473 = ssub.s32 1024, 1024
          %474 = vsyncadd %s468, %s473
          %s475 = smul.addr %s41, 16
          %s476 = smul.addr %s475, 64
          %s477 = scalar_lea.hbm %s4, %s476
          %s478 = sshll.u32 %s471, 4
          %s479 = int_to_ptr.vmem [resolvable:$true] %s478
          %484 = dma.hbm_to_vmem [thread:$0]  %s477, 1024, %s479, %s468, 64, 64, 4
        $region44: #{tpu_custom_call.1} parent=23 // pred_fallthru
          _
        // Predicated region
        $region45: #{tpu_custom_call.1} parent=23 // pred_check
          %p485 = pneg %p195
        $region46: #{tpu_custom_call.1} parent=23 // pred_check_branch
          %487 = sbr.rel (%p485) target = $region48
        $region47: #{tpu_custom_call.1} parent=23 // pred_region
          %p488 = scmp.lt.s32.totalorder %s41, 1
          %s489 = scalar_select %p488, %s41, 1
          %s490 = scalar_lea.vmem %s5, %s489
        $region48: #{tpu_custom_call.1} parent=23 // pred_fallthru
          _
        // Predicated region
        $region49: #{tpu_custom_call.1} parent=23 // pred_check
          %p491 = pneg %p221
        $region50: #{tpu_custom_call.1} parent=23 // pred_check_branch
          %493 = sbr.rel (%p491) target = $region52
        $region51: #{tpu_custom_call.1} parent=23 // pred_region
          %s494 = sand.u32 %s33, 1
          %s495 = scalar_lea.sflag [#allocation10], %s494
          %s496 = sand.u32 %s211, 1
          %s497 = smul.addr %s496, 128
          %s498 = scalar_lea.vmem [#allocation11], %s497
          %s500 = ssub.s32 2048, 2048
          %501 = vsyncadd %s495, %s500
          %s502 = smul.addr %s41, 32
          %s503 = smul.addr %s502, 64
          %s504 = scalar_lea.hbm %s6, %s503
          %s505 = sshll.u32 %s498, 4
          %s506 = int_to_ptr.vmem [resolvable:$true] %s505
          %511 = dma.hbm_to_vmem [thread:$0]  %s504, 2048, %s506, %s495, 128, 128, 8
        $region52: #{tpu_custom_call.1} parent=23 // pred_fallthru
          _
        // Predicated region
        $region53: #{tpu_custom_call.1} parent=23 // pred_check
          %p512 = pneg %p247
        $region54: #{tpu_custom_call.1} parent=23 // pred_check_branch
          %514 = sbr.rel (%p512) target = $region56
        $region55: #{tpu_custom_call.1} parent=23 // pred_region
          %p515 = scmp.lt.s32.totalorder %s41, 1
          %s516 = scalar_select %p515, %s41, 1
          %s517 = smul.addr %s516, 2
          %s518 = scalar_lea.vmem %s7, %s517
        $region56: #{tpu_custom_call.1} parent=23 // pred_fallthru
          _
        // Predicated region
        $region57: #{tpu_custom_call.1} parent=23 // pred_check
          %p519 = pneg %p273
        $region58: #{tpu_custom_call.1} parent=23 // pred_check_branch
          %521 = sbr.rel (%p519) target = $region60
        $region59: #{tpu_custom_call.1} parent=23 // pred_region
          %s522 = sand.u32 %s263, 1
          %s523 = scalar_lea.sflag [#allocation13], %s522
          %s524 = sand.u32 %s263, 1
          %s525 = smul.addr %s524, 128
          %s526 = scalar_lea.vmem [#allocation12], %s525
          %s528 = ssub.s32 2048, 2048
          %529 = vsyncadd %s523, %s528
          %s530 = smul.addr %s41, 32
          %s531 = smul.addr %s530, 64
          %s532 = scalar_lea.hbm %s8, %s531
          %s533 = sshll.u32 %s526, 4
          %s534 = int_to_ptr.vmem [resolvable:$true] %s533
          %539 = dma.hbm_to_vmem [thread:$0]  %s532, 2048, %s534, %s523, 64, 64, 4
        $region60: #{tpu_custom_call.1} parent=23 // pred_fallthru
          _
        // Predicated region
        $region61: #{tpu_custom_call.1} parent=23 // pred_check
          %p540 = pneg %p299
        $region62: #{tpu_custom_call.1} parent=23 // pred_check_branch
          %542 = sbr.rel (%p540) target = $region64
        $region63: #{tpu_custom_call.1} parent=23 // pred_region
          %p543 = scmp.lt.s32.totalorder %s41, 1
          %s544 = scalar_select %p543, %s41, 1
          %s545 = scalar_lea.vmem %s9, %s544
        $region64: #{tpu_custom_call.1} parent=23 // pred_fallthru
          _
      $region24: #{tpu_custom_call.1} parent=5 // pred_fallthru
        _
      %p546 = scmp.le.s32.totalorder 1, %s33
      %p547 = scmp.lt.s32.totalorder %s33, 5
      %p548 = pnand %p546, %p547
      %p549 = pneg %p548
      // Predicated region
      $region65: #{tpu_custom_call.1} parent=5 // pred_check
        _
      $region66: #{tpu_custom_call.1} parent=5 // pred_check_branch
        %551 = sbr.rel (%p548) target = $region68
      $region67: #{tpu_custom_call.1} parent=5 // pred_region
        %s552 = ssub.s32 %s33, 1
        %s553 = sand.u32 %s58, 1
        %s554 = scalar_lea.sflag [#allocation4], %s553
        %s555 = sand.u32 %s58, 1
        %s556 = smul.addr %s555, 16
        %s557 = scalar_lea.vmem [#allocation3], %s556
        // Predicated region
        $region69: #{tpu_custom_call.1} parent=67 // pred_check
          %p558 = pneg %p71
        $region70: #{tpu_custom_call.1} parent=67 // pred_check_branch
          %560 = sbr.rel (%p558) target = $region72
        $region71: #{tpu_custom_call.1} parent=67 // pred_region
          %561 = dma.done %s554, 256
        $region72: #{tpu_custom_call.1} parent=67 // pred_fallthru
          _
        %s562 = sand.u32 %s38, 1
        %s563 = scalar_lea.sflag [#allocation7], %s562
        %s564 = sand.u32 %s84, 1
        %s565 = scalar_lea.vmem [#allocation6], %s564
        // Predicated region
        $region73: #{tpu_custom_call.1} parent=67 // pred_check
          %p566 = pneg %p97
        $region74: #{tpu_custom_call.1} parent=67 // pred_check_branch
          %568 = sbr.rel (%p566) target = $region76
        $region75: #{tpu_custom_call.1} parent=67 // pred_region
          %569 = dma.done %s563, 16
        $region76: #{tpu_custom_call.1} parent=67 // pred_fallthru
          _
        %s570 = sand.u32 %s38, 1
        %s571 = scalar_lea.sflag [#allocation7], %s570
        %s572 = sand.u32 %s110, 1
        %s573 = smul.addr %s572, 192
        %s574 = scalar_lea.vmem [#allocation8], %s573
        // Predicated region
        $region77: #{tpu_custom_call.1} parent=67 // pred_check
          %p575 = pneg %p123
        $region78: #{tpu_custom_call.1} parent=67 // pred_check_branch
          %577 = sbr.rel (%p575) target = $region80
        $region79: #{tpu_custom_call.1} parent=67 // pred_region
          %578 = dma.done %s571, 3072
        $region80: #{tpu_custom_call.1} parent=67 // pred_fallthru
          _
        %s579 = sand.u32 %s38, 1
        %s580 = scalar_lea.sflag [#allocation10], %s579
        %s581 = sand.u32 %s162, 1
        %s582 = smul.addr %s581, 64
        %s583 = scalar_lea.vmem [#allocation9], %s582
        // Predicated region
        $region81: #{tpu_custom_call.1} parent=67 // pred_check
          %p584 = pneg %p175
        $region82: #{tpu_custom_call.1} parent=67 // pred_check_branch
          %586 = sbr.rel (%p584) target = $region84
        $region83: #{tpu_custom_call.1} parent=67 // pred_region
          %587 = dma.done %s580, 1024
        $region84: #{tpu_custom_call.1} parent=67 // pred_fallthru
          _
        %s588 = sand.u32 %s38, 1
        %s589 = scalar_lea.sflag [#allocation10], %s588
        %s590 = sand.u32 %s214, 1
        %s591 = smul.addr %s590, 128
        %s592 = scalar_lea.vmem [#allocation11], %s591
        // Predicated region
        $region85: #{tpu_custom_call.1} parent=67 // pred_check
          %p593 = pneg %p227
        $region86: #{tpu_custom_call.1} parent=67 // pred_check_branch
          %595 = sbr.rel (%p593) target = $region88
        $region87: #{tpu_custom_call.1} parent=67 // pred_region
          %596 = dma.done %s589, 2048
        $region88: #{tpu_custom_call.1} parent=67 // pred_fallthru
          _
        %s597 = sand.u32 %s266, 1
        %s598 = scalar_lea.sflag [#allocation13], %s597
        %s599 = sand.u32 %s266, 1
        %s600 = smul.addr %s599, 128
        %s601 = scalar_lea.vmem [#allocation12], %s600
        // Predicated region
        $region89: #{tpu_custom_call.1} parent=67 // pred_check
          %p602 = pneg %p279
        $region90: #{tpu_custom_call.1} parent=67 // pred_check_branch
          %604 = sbr.rel (%p602) target = $region92
        $region91: #{tpu_custom_call.1} parent=67 // pred_region
          %605 = dma.done %s598, 2048
        $region92: #{tpu_custom_call.1} parent=67 // pred_fallthru
          _
        %s606 = sand.u32 %s58, 1
        %s607 = scalar_lea.sflag [#allocation4], %s606
        %s608 = sand.u32 %s58, 1
        %s609 = smul.addr %s608, 16
        %s610 = scalar_lea.vmem [#allocation3], %s609
        %p611 = pneg %p71
        %p612 = pneg %p68
        %s613 = sand.u32 %s38, 1
        %s614 = scalar_lea.sflag [#allocation7], %s613
        %s615 = sand.u32 %s84, 1
        %s616 = scalar_lea.vmem [#allocation6], %s615
        %p617 = pneg %p97
        %p618 = pneg %p94
        %s619 = sand.u32 %s38, 1
        %s620 = scalar_lea.sflag [#allocation7], %s619
        %s621 = sand.u32 %s110, 1
        %s622 = smul.addr %s621, 192
        %s623 = scalar_lea.vmem [#allocation8], %s622
        %p624 = pneg %p123
        %p625 = pneg %p120
        %p626 = scmp.lt.s32.totalorder %s43, 1
        %s627 = scalar_select %p626, %s43, 1
        %s628 = smul.addr %s627, 3
        %s629 = scalar_lea.vmem %s3, %s628
        %p630 = pneg %p149
        %p631 = pneg %p146
        %s632 = sand.u32 %s38, 1
        %s633 = scalar_lea.sflag [#allocation10], %s632
        %s634 = sand.u32 %s162, 1
        %s635 = smul.addr %s634, 64
        %s636 = scalar_lea.vmem [#allocation9], %s635
        %p637 = pneg %p175
        %p638 = pneg %p172
        %p639 = scmp.lt.s32.totalorder %s43, 1
        %s640 = scalar_select %p639, %s43, 1
        %s641 = scalar_lea.vmem %s5, %s640
        %p642 = pneg %p201
        %p643 = pneg %p198
        %s644 = sand.u32 %s38, 1
        %s645 = scalar_lea.sflag [#allocation10], %s644
        %s646 = sand.u32 %s214, 1
        %s647 = smul.addr %s646, 128
        %s648 = scalar_lea.vmem [#allocation11], %s647
        %p649 = pneg %p227
        %p650 = pneg %p224
        %p651 = scmp.lt.s32.totalorder %s43, 1
        %s652 = scalar_select %p651, %s43, 1
        %s653 = smul.addr %s652, 2
        %s654 = scalar_lea.vmem %s7, %s653
        %p655 = pneg %p253
        %p656 = pneg %p250
        %s657 = sand.u32 %s266, 1
        %s658 = scalar_lea.sflag [#allocation13], %s657
        %s659 = sand.u32 %s266, 1
        %s660 = smul.addr %s659, 128
        %s661 = scalar_lea.vmem [#allocation12], %s660
        %p662 = pneg %p279
        %p663 = pneg %p276
        %p664 = scmp.lt.s32.totalorder %s43, 1
        %s665 = scalar_select %p664, %s43, 1
        %s666 = scalar_lea.vmem %s9, %s665
        %p667 = pneg %p305
        %p668 = pneg %p302
        %p669 = pneg %p326
        %p670 = pneg %p323
        %p671 = pneg %p347
        %p672 = pneg %p344
        %p673 = pneg %p373
        %p674 = pneg %p370
        %s675 = sand.u32 %s360, 1
        %s676 = scalar_lea.sflag [#allocation5], %s675
        %s677 = sand.u32 %s360, 1
        %s678 = smul.addr %s677, 16
        %s679 = scalar_lea.vmem [#allocation14], %s678
        %p680 = scmp.lt.s32.totalorder %s43, 1
        %s681 = scalar_select %p680, %s43, 1
        %s682 = smul.addr %s681, 3
        %s683 = scalar_lea.vmem %s3, %s682
        %p684 = scmp.lt.s32.totalorder %s43, 1
        %s685 = scalar_select %p684, %s43, 1
        %s686 = scalar_lea.vmem %s5, %s685
        %p687 = scmp.lt.s32.totalorder %s43, 1
        %s688 = scalar_select %p687, %s43, 1
        %s689 = smul.addr %s688, 2
        %s690 = scalar_lea.vmem %s7, %s689
        %p691 = scmp.lt.s32.totalorder %s43, 1
        %s692 = scalar_select %p691, %s43, 1
        %s693 = scalar_lea.vmem %s9, %s692
        %p695 = scmp.eq.s32.totalorder %s43, 0
        // Predicated region
        $region93: #{tpu_custom_call.1} parent=67 // pred_check
          %p696 = pneg %p695
        $region94: #{tpu_custom_call.1} parent=67 // pred_check_branch
          %698 = sbr.rel (%p696) target = $region96
        $region95: #{tpu_custom_call.1} parent=67 // pred_region
          %v699 = vld [vmem:[%s557] sm:$0xff]
          %v700 = vld [vmem:[%s557 + $0x8] sm:$0xff]
          %701 = vst [vmem:[#allocation2] sm:$0xff] %v699
          %702 = vst [vmem:[#allocation2 + $0x8] sm:$0xff] %v700
        $region96: #{tpu_custom_call.1} parent=67 // pred_fallthru
          _
        %v703 = vld [vmem:[#allocation2] sm:$0xff]
        %v704 = vld [vmem:[#allocation2 + $0x8] sm:$0xff]
        %v705 = vld [vmem:[%s565] sm:$0x1]
        %v706 = vmul.f32 %v705, -1e+09
        %v707 = vlaneseq
        %v708 = vshrl.u32 %v707, 7
        %v709 = vadd.s32 %v708, 8
        %v710 = vlaneseq
        %v711 = vand.u32 %v710, 127
        %vm712 = vcmp.gt.s32.totalorder %v711, %v708
        %vm713 = vcmp.gt.s32.totalorder %v711, %v709
        %v715 = vlaneseq
        %v716 = vshrl.u32 %v715, 7
        %v717 = vsub.s32 0, %v716
        %v718 = vrot.slane %v706, %v717
        %v720 = vsel %vm712, -1e+09, %v718
        %v721 = vsel %vm713, -1e+09, %v718
        %v722 = vpack.c.bf16 %v704, %v703
        %v723 = vld [vmem:[%s574] sm:$0xff]
        %v724 = vld [vmem:[%s574 + $0x8] sm:$0xf]
        %v725 = vld [vmem:[%s574 + $0xc] sm:$0xff]
        %v726 = vld [vmem:[%s574 + $0x14] sm:$0xf]
        %v727 = vld [vmem:[%s574 + $0x18] sm:$0xff]
        %v728 = vld [vmem:[%s574 + $0x20] sm:$0xf]
        %v729 = vld [vmem:[%s574 + $0x24] sm:$0xff]
        %v730 = vld [vmem:[%s574 + $0x2c] sm:$0xf]
        %v731 = vld [vmem:[%s574 + $0x30] sm:$0xff]
        %v732 = vld [vmem:[%s574 + $0x38] sm:$0xf]
        %v733 = vld [vmem:[%s574 + $0x3c] sm:$0xff]
        %v734 = vld [vmem:[%s574 + $0x44] sm:$0xf]
        %v735 = vld [vmem:[%s574 + $0x48] sm:$0xff]
        %v736 = vld [vmem:[%s574 + $0x50] sm:$0xf]
        %v737 = vld [vmem:[%s574 + $0x54] sm:$0xff]
        %v738 = vld [vmem:[%s574 + $0x5c] sm:$0xf]
        %v739 = vld [vmem:[%s574 + $0x60] sm:$0xff]
        %v740 = vld [vmem:[%s574 + $0x68] sm:$0xf]
        %v741 = vld [vmem:[%s574 + $0x6c] sm:$0xff]
        %v742 = vld [vmem:[%s574 + $0x74] sm:$0xf]
        %v743 = vld [vmem:[%s574 + $0x78] sm:$0xff]
        %v744 = vld [vmem:[%s574 + $0x80] sm:$0xf]
        %v745 = vld [vmem:[%s574 + $0x84] sm:$0xff]
        %v746 = vld [vmem:[%s574 + $0x8c] sm:$0xf]
        %v747 = vld [vmem:[%s574 + $0x90] sm:$0xff]
        %v748 = vld [vmem:[%s574 + $0x98] sm:$0xf]
        %v749 = vld [vmem:[%s574 + $0x9c] sm:$0xff]
        %v750 = vld [vmem:[%s574 + $0xa4] sm:$0xf]
        %v751 = vld [vmem:[%s574 + $0xa8] sm:$0xff]
        %v752 = vld [vmem:[%s574 + $0xb0] sm:$0xf]
        %v753 = vld [vmem:[%s574 + $0xb4] sm:$0xff]
        %v754 = vld [vmem:[%s574 + $0xbc] sm:$0xf]
        %v755 = vld [vmem:[%s683] sm:$0x7]
        %v757 = vlaneseq
        %v758 = vshrl.u32 %v757, 7
        %v759 = vsub.s32 0, %v758
        %v760 = vrot.slane %v755, %v759
        %v761 = vlaneseq
        %v762 = vshrl.u32 %v761, 7
        %v763 = vsub.s32 1, %v762
        %v764 = vrot.slane %v755, %v763
        %v765 = vlaneseq
        %v766 = vshrl.u32 %v765, 7
        %v767 = vsub.s32 2, %v766
        %v768 = vrot.slane %v755, %v767
        %v804 = vunpack.c.l.b16 %v723
        %v805 = vunpack.c.h.b16 %v723
        %v806 = vunpack.c.l.b16 %v724
        %v807 = vunpack.c.l.b16 %v725
        %v808 = vunpack.c.h.b16 %v725
        %v809 = vunpack.c.l.b16 %v726
        %v810 = vunpack.c.l.b16 %v727
        %v811 = vunpack.c.h.b16 %v727
        %v812 = vunpack.c.l.b16 %v728
        %v813 = vunpack.c.l.b16 %v729
        %v814 = vunpack.c.h.b16 %v729
        %v815 = vunpack.c.l.b16 %v730
        %v816 = vunpack.c.l.b16 %v731
        %v817 = vunpack.c.h.b16 %v731
        %v818 = vunpack.c.l.b16 %v732
        %v819 = vunpack.c.l.b16 %v733
        %v820 = vunpack.c.h.b16 %v733
        %v821 = vunpack.c.l.b16 %v734
        %v822 = vunpack.c.l.b16 %v735
        %v823 = vunpack.c.h.b16 %v735
        %v824 = vunpack.c.l.b16 %v736
        %v825 = vunpack.c.l.b16 %v737
        %v826 = vunpack.c.h.b16 %v737
        %v827 = vunpack.c.l.b16 %v738
        %v828 = vunpack.c.l.b16 %v739
        %v829 = vunpack.c.h.b16 %v739
        %v830 = vunpack.c.l.b16 %v740
        %v831 = vunpack.c.l.b16 %v741
        %v832 = vunpack.c.h.b16 %v741
        %v833 = vunpack.c.l.b16 %v742
        %v834 = vunpack.c.l.b16 %v743
        %v835 = vunpack.c.h.b16 %v743
        %v836 = vunpack.c.l.b16 %v744
        %v837 = vunpack.c.l.b16 %v745
        %v838 = vunpack.c.h.b16 %v745
        %v839 = vunpack.c.l.b16 %v746
        %v840 = vunpack.c.l.b16 %v747
        %v841 = vunpack.c.h.b16 %v747
        %v842 = vunpack.c.l.b16 %v748
        %v843 = vunpack.c.l.b16 %v749
        %v844 = vunpack.c.h.b16 %v749
        %v845 = vunpack.c.l.b16 %v750
        %v846 = vunpack.c.l.b16 %v751
        %v847 = vunpack.c.h.b16 %v751
        %v848 = vunpack.c.l.b16 %v752
        %v849 = vunpack.c.l.b16 %v753
        %v850 = vunpack.c.h.b16 %v753
        %v851 = vunpack.c.l.b16 %v754
        %v852 = vpack.c.b16 %v807, %v804
        %v853 = vpack.c.b16 %v808, %v805
        %v854 = vpack.c.b16 %v809, %v806
        %v855 = vpack.c.b16 %v813, %v810
        %v856 = vpack.c.b16 %v814, %v811
        %v857 = vpack.c.b16 %v815, %v812
        %v858 = vpack.c.b16 %v819, %v816
        %v859 = vpack.c.b16 %v820, %v817
        %v860 = vpack.c.b16 %v821, %v818
        %v861 = vpack.c.b16 %v825, %v822
        %v862 = vpack.c.b16 %v826, %v823
        %v863 = vpack.c.b16 %v827, %v824
        %v864 = vpack.c.b16 %v831, %v828
        %v865 = vpack.c.b16 %v832, %v829
        %v866 = vpack.c.b16 %v833, %v830
        %v867 = vpack.c.b16 %v837, %v834
        %v868 = vpack.c.b16 %v838, %v835
        %v869 = vpack.c.b16 %v839, %v836
        %v870 = vpack.c.b16 %v843, %v840
        %v871 = vpack.c.b16 %v844, %v841
        %v872 = vpack.c.b16 %v845, %v842
        %v873 = vpack.c.b16 %v849, %v846
        %v874 = vpack.c.b16 %v850, %v847
        %v875 = vpack.c.b16 %v851, %v848
        %900 = vmatprep.subr.bf16.mxu0 %v853
        %901 = vmatpush1.bf16.msra.mxu0 %v852
        %902 = vmatprep.subr.bf16.mxu0 %v856
        %903 = vmatpush1.bf16.msra.mxu0 %v855
        %904 = vmatprep.subr.bf16.mxu0 %v859
        %905 = vmatpush1.bf16.msra.mxu0 %v858
        %906 = vmatprep.subr.bf16.mxu0 %v862
        %907 = vmatpush1.bf16.msra.mxu0 %v861
        %908 = vmatprep.subr.bf16.mxu0 %v865
        %909 = vmatpush1.bf16.msra.mxu0 %v864
        %910 = vmatprep.subr.bf16.mxu0 %v868
        %911 = vmatpush1.bf16.msra.mxu0 %v867
        %912 = vmatprep.subr.bf16.mxu0 %v871
        %913 = vmatpush1.bf16.msra.mxu0 %v870
        %914 = vmatprep.subr.bf16.mxu0 %v874
        %915 = vmatpush1.bf16.msra.mxu0 %v873
        %916 = vmatprep.subr.bf16.mxu0 0
        %917 = vmatpush1.bf16.msra.mxu0 0
        %918 = vmatprep.subr.bf16.mxu0 0
        %919 = vmatpush1.bf16.msra.mxu0 0
        %920 = vmatprep.subr.bf16.mxu0 0
        %921 = vmatpush1.bf16.msra.mxu0 0
        %922 = vmatprep.subr.bf16.mxu0 0
        %923 = vmatpush1.bf16.msra.mxu0 0
        %924 = vmatprep.subr.bf16.mxu0 0
        %925 = vmatpush1.bf16.msra.mxu0 0
        %926 = vmatprep.subr.bf16.mxu0 0
        %927 = vmatpush1.bf16.msra.mxu0 0
        %928 = vmatprep.subr.bf16.mxu0 0
        %929 = vmatpush1.bf16.msra.mxu0 0
        %930 = vmatprep.subr.bf16.mxu0 0
        %931 = vmatpush1.bf16.msra.mxu0 0
        %932 = vmatprep.mubr.bf16.mxu0 0
        %933 = vmatmul.mubr.bf16.gmra.mrb[0].mxu0 %v722
        %v934 = vpop.f32.mrb[0].mxu0
        %v935 = vadd.f32 %v760, %v934
        %v936 = vpop.f32.mrb[0].mxu0
        %v937 = vadd.f32 %v764, %v936
        %v938 = vpop.f32.mrb[0].mxu0
        %v939 = vadd.f32 %v760, %v938
        %v940 = vpop.f32.mrb[0].mxu0
        %v941 = vadd.f32 %v764, %v940
        %942 = vdwg.mxu0
        %943 = vmatprep.subr.bf16.mxu0 0
        %944 = vmatpush1.bf16.msra.mxu0 %v854
        %945 = vmatprep.subr.bf16.mxu0 0
        %946 = vmatpush1.bf16.msra.mxu0 %v857
        %947 = vmatprep.subr.bf16.mxu0 0
        %948 = vmatpush1.bf16.msra.mxu0 %v860
        %949 = vmatprep.subr.bf16.mxu0 0
        %950 = vmatpush1.bf16.msra.mxu0 %v863
        %951 = vmatprep.subr.bf16.mxu0 0
        %952 = vmatpush1.bf16.msra.mxu0 %v866
        %953 = vmatprep.subr.bf16.mxu0 0
        %954 = vmatpush1.bf16.msra.mxu0 %v869
        %955 = vmatprep.subr.bf16.mxu0 0
        %956 = vmatpush1.bf16.msra.mxu0 %v872
        %957 = vmatprep.subr.bf16.mxu0 0
        %958 = vmatpush1.bf16.msra.mxu0 %v875
        %959 = vmatprep.subr.bf16.mxu0 0
        %960 = vmatpush1.bf16.msra.mxu0 0
        %961 = vmatprep.subr.bf16.mxu0 0
        %962 = vmatpush1.bf16.msra.mxu0 0
        %963 = vmatprep.subr.bf16.mxu0 0
        %964 = vmatpush1.bf16.msra.mxu0 0
        %965 = vmatprep.subr.bf16.mxu0 0
        %966 = vmatpush1.bf16.msra.mxu0 0
        %967 = vmatprep.subr.bf16.mxu0 0
        %968 = vmatpush1.bf16.msra.mxu0 0
        %969 = vmatprep.subr.bf16.mxu0 0
        %970 = vmatpush1.bf16.msra.mxu0 0
        %971 = vmatprep.subr.bf16.mxu0 0
        %972 = vmatpush1.bf16.msra.mxu0 0
        %973 = vmatprep.subr.bf16.mxu0 0
        %974 = vmatpush1.bf16.msra.mxu0 0
        %975 = vmatprep.mubr.bf16.mxu0 0
        %976 = vmatmul.mubr.bf16.gmra.mrb[0].mxu0 %v722
        %v977 = vpop.f32.mrb[0].mxu0
        %v978 = vadd.f32 %v768, %v977
        %v979 = vpop.f32.mrb[0].mxu0
        %v980 = vpop.f32.mrb[0].mxu0
        %v981 = vadd.f32 %v768, %v980
        %v982 = vpop.f32.mrb[0].mxu0
        %983 = vdwg.mxu0
        %v984 = vmul.f32 %v935, 0.17677669
        %v985 = vmul.f32 %v939, 0.17677669
        %v986 = vpack.c.bf16 %v985, %v984
        %v987 = vpack.c.bf16 %v941, %v937
        %v988 = vpack.c.bf16 %v981, %v978
        %vm989 = vcmask 261120
        %v991 = vsel %vm989, %v986, 0
        %v994 = vsel %vm989, %v987, 0
        %996 = vmatprep.subr.bf16.mxu0 0
        %997 = vmatpush1.bf16.xpose.msra.mxu0 %v994
        %998 = vmatprep.subr.bf16.mxu0 0
        %999 = vmatpush1.bf16.xpose.msra.mxu0 0
        %1000 = vmatprep.subr.bf16.mxu0 0
        %1001 = vmatpush1.bf16.xpose.msra.mxu0 0
        %1002 = vmatprep.subr.bf16.mxu0 0
        %1003 = vmatpush1.bf16.xpose.msra.mxu0 0
        %1004 = vmatprep.subr.bf16.mxu0 0
        %1005 = vmatpush1.bf16.xpose.msra.mxu0 0
        %1006 = vmatprep.subr.bf16.mxu0 0
        %1007 = vmatpush1.bf16.xpose.msra.mxu0 0
        %1008 = vmatprep.subr.bf16.mxu0 0
        %1009 = vmatpush1.bf16.xpose.msra.mxu0 0
        %1010 = vmatprep.subr.bf16.mxu0 0
        %1011 = vmatpush1.bf16.xpose.msra.mxu0 0
        %1012 = vmatprep.subr.bf16.mxu0 0
        %1013 = vmatpush1.bf16.xpose.msra.mxu0 0
        %1014 = vmatprep.subr.bf16.mxu0 0
        %1015 = vmatpush1.bf16.xpose.msra.mxu0 0
        %1016 = vmatprep.subr.bf16.mxu0 0
        %1017 = vmatpush1.bf16.xpose.msra.mxu0 0
        %1018 = vmatprep.subr.bf16.mxu0 0
        %1019 = vmatpush1.bf16.xpose.msra.mxu0 0
        %1020 = vmatprep.subr.bf16.mxu0 0
        %1021 = vmatpush1.bf16.xpose.msra.mxu0 0
        %1022 = vmatprep.subr.bf16.mxu0 0
        %1023 = vmatpush1.bf16.xpose.msra.mxu0 0
        %1024 = vmatprep.subr.bf16.mxu0 0
        %1025 = vmatpush1.bf16.xpose.msra.mxu0 0
        %1026 = vmatprep.subr.bf16.mxu0 0
        %1027 = vmatpush1.bf16.xpose.msra.mxu0 0
        %1028 = vmatprep.mubr.bf16.mxu0 0
        %1029 = vmatmul.mubr.bf16.gmra.mrb[0].mxu0 %v991
        %v1030 = vpop.f32.mrb[0].mxu0
        %v1031 = vadd.f32 %v720, %v1030
        %v1032 = vpop.f32.mrb[0].mxu0
        %v1033 = vpop.f32.mrb[0].mxu0
        %v1034 = vadd.f32 %v721, %v1033
        %v1035 = vpop.f32.mrb[0].mxu0
        %1036 = vdwg.mxu0
        %vm1037 = vcmask 130048
        %v1038 = vsel %vm1037, %v1031, -inf
        %1039 = vmax.xlane.f32.xlu0 %v1038
        %v1040 = vpop.xlane.xlu0 %1039
        %v1041 = vsel %vm1037, %v1034, -inf
        %1042 = vmax.xlane.f32.xlu0 %v1041
        %v1043 = vpop.xlane.xlu0 %1042
        %v1044 = vsub.f32 %v1031, %v1040
        %v1045 = vsub.f32 %v1034, %v1043
        %v1046 = vmul.f32 %v1044, 1.442695
        %v1047 = vpow.pop %v1046
        %v1048 = vmul.f32 %v1045, 1.442695
        %v1049 = vpow.pop %v1048
        %v1050 = vsel %vm1037, %v1047, 0.0
        %1051 = vadd.xlane.f32.xlu0 %v1050
        %v1052 = vpop.xlane.xlu0 %1051
        %v1053 = vsel %vm1037, %v1049, 0.0
        %1054 = vadd.xlane.f32.xlu0 %v1053
        %v1055 = vpop.xlane.xlu0 %1054
        %v1056 = vrcp.pop %v1052
        %v1057 = vrcp.pop %v1055
        %v1058 = vmul.f32 %v1047, %v1056
        %v1059 = vmul.f32 %v1049, %v1057
        %v1060 = vpack.c.bf16 %v1059, %v1058
        %v1062 = vsel %vm1037, %v1060, 0
        %1064 = vmatprep.subr.bf16.mxu0 0
        %1065 = vmatpush1.bf16.msra.mxu0 %v988
        %1066 = vmatprep.subr.bf16.mxu0 0
        %1067 = vmatpush1.bf16.msra.mxu0 0
        %1068 = vmatprep.subr.bf16.mxu0 0
        %1069 = vmatpush1.bf16.msra.mxu0 0
        %1070 = vmatprep.subr.bf16.mxu0 0
        %1071 = vmatpush1.bf16.msra.mxu0 0
        %1072 = vmatprep.subr.bf16.mxu0 0
        %1073 = vmatpush1.bf16.msra.mxu0 0
        %1074 = vmatprep.subr.bf16.mxu0 0
        %1075 = vmatpush1.bf16.msra.mxu0 0
        %1076 = vmatprep.subr.bf16.mxu0 0
        %1077 = vmatpush1.bf16.msra.mxu0 0
        %1078 = vmatprep.subr.bf16.mxu0 0
        %1079 = vmatpush1.bf16.msra.mxu0 0
        %1080 = vmatprep.subr.bf16.mxu0 0
        %1081 = vmatpush1.bf16.msra.mxu0 0
        %1082 = vmatprep.subr.bf16.mxu0 0
        %1083 = vmatpush1.bf16.msra.mxu0 0
        %1084 = vmatprep.subr.bf16.mxu0 0
        %1085 = vmatpush1.bf16.msra.mxu0 0
        %1086 = vmatprep.subr.bf16.mxu0 0
        %1087 = vmatpush1.bf16.msra.mxu0 0
        %1088 = vmatprep.subr.bf16.mxu0 0
        %1089 = vmatpush1.bf16.msra.mxu0 0
        %1090 = vmatprep.subr.bf16.mxu0 0
        %1091 = vmatpush1.bf16.msra.mxu0 0
        %1092 = vmatprep.subr.bf16.mxu0 0
        %1093 = vmatpush1.bf16.msra.mxu0 0
        %1094 = vmatprep.subr.bf16.mxu0 0
        %1095 = vmatpush1.bf16.msra.mxu0 0
        %1096 = vmatprep.mubr.bf16.mxu0 0
        %1097 = vmatmul.mubr.bf16.gmra.mrb[0].mxu0 %v1062
        %v1098 = vpop.f32.mrb[0].mxu0
        %v1099 = vadd.f32 0.0, %v1098
        %v1100 = vpop.f32.mrb[0].mxu0
        %v1101 = vpop.f32.mrb[0].mxu0
        %v1102 = vadd.f32 0.0, %v1101
        %v1103 = vpop.f32.mrb[0].mxu0
        %1104 = vdwg.mxu0
        %1106 = vrot.lane.b32.xlu0 %v986, 96
        %v1107 = vpop.permute.xlu0 %1106
        %1109 = vrot.lane.b32.xlu0 %v987, 96
        %v1110 = vpop.permute.xlu0 %1109
        %v1112 = vsel %vm989, %v1107, 0
        %v1115 = vsel %vm989, %v1110, 0
        %1117 = vmatprep.subr.bf16.mxu0 0
        %1118 = vmatpush1.bf16.xpose.msra.mxu0 %v1115
        %1119 = vmatprep.subr.bf16.mxu0 0
        %1120 = vmatpush1.bf16.xpose.msra.mxu0 0
        %1121 = vmatprep.subr.bf16.mxu0 0
        %1122 = vmatpush1.bf16.xpose.msra.mxu0 0
        %1123 = vmatprep.subr.bf16.mxu0 0
        %1124 = vmatpush1.bf16.xpose.msra.mxu0 0
        %1125 = vmatprep.subr.bf16.mxu0 0
        %1126 = vmatpush1.bf16.xpose.msra.mxu0 0
        %1127 = vmatprep.subr.bf16.mxu0 0
        %1128 = vmatpush1.bf16.xpose.msra.mxu0 0
        %1129 = vmatprep.subr.bf16.mxu0 0
        %1130 = vmatpush1.bf16.xpose.msra.mxu0 0
        %1131 = vmatprep.subr.bf16.mxu0 0
        %1132 = vmatpush1.bf16.xpose.msra.mxu0 0
        %1133 = vmatprep.subr.bf16.mxu0 0
        %1134 = vmatpush1.bf16.xpose.msra.mxu0 0
        %1135 = vmatprep.subr.bf16.mxu0 0
        %1136 = vmatpush1.bf16.xpose.msra.mxu0 0
        %1137 = vmatprep.subr.bf16.mxu0 0
        %1138 = vmatpush1.bf16.xpose.msra.mxu0 0
        %1139 = vmatprep.subr.bf16.mxu0 0
        %1140 = vmatpush1.bf16.xpose.msra.mxu0 0
        %1141 = vmatprep.subr.bf16.mxu0 0
        %1142 = vmatpush1.bf16.xpose.msra.mxu0 0
        %1143 = vmatprep.subr.bf16.mxu0 0
        %1144 = vmatpush1.bf16.xpose.msra.mxu0 0
        %1145 = vmatprep.subr.bf16.mxu0 0
        %1146 = vmatpush1.bf16.xpose.msra.mxu0 0
        %1147 = vmatprep.subr.bf16.mxu0 0
        %1148 = vmatpush1.bf16.xpose.msra.mxu0 0
        %1149 = vmatprep.mubr.bf16.mxu0 0
        %1150 = vmatmul.mubr.bf16.gmra.mrb[0].mxu0 %v1112
        %v1151 = vpop.f32.mrb[0].mxu0
        %v1152 = vadd.f32 %v720, %v1151
        %v1153 = vpop.f32.mrb[0].mxu0
        %v1154 = vpop.f32.mrb[0].mxu0
        %v1155 = vadd.f32 %v721, %v1154
        %v1156 = vpop.f32.mrb[0].mxu0
        %1157 = vdwg.mxu0
        %v1158 = vsel %vm1037, %v1152, -inf
        %1159 = vmax.xlane.f32.xlu0 %v1158
        %v1160 = vpop.xlane.xlu0 %1159
        %v1161 = vsel %vm1037, %v1155, -inf
        %1162 = vmax.xlane.f32.xlu0 %v1161
        %v1163 = vpop.xlane.xlu0 %1162
        %v1164 = vsub.f32 %v1152, %v1160
        %v1165 = vsub.f32 %v1155, %v1163
        %v1166 = vmul.f32 %v1164, 1.442695
        %v1167 = vpow.pop %v1166
        %v1168 = vmul.f32 %v1165, 1.442695
        %v1169 = vpow.pop %v1168
        %v1170 = vsel %vm1037, %v1167, 0.0
        %1171 = vadd.xlane.f32.xlu0 %v1170
        %v1172 = vpop.xlane.xlu0 %1171
        %v1173 = vsel %vm1037, %v1169, 0.0
        %1174 = vadd.xlane.f32.xlu0 %v1173
        %v1175 = vpop.xlane.xlu0 %1174
        %v1176 = vrcp.pop %v1172
        %v1177 = vrcp.pop %v1175
        %v1178 = vmul.f32 %v1167, %v1176
        %v1179 = vmul.f32 %v1169, %v1177
        %v1180 = vpack.c.bf16 %v1179, %v1178
        %1182 = vrot.lane.b32.xlu0 %v988, 96
        %v1183 = vpop.permute.xlu0 %1182
        %v1186 = vsel %vm1037, %v1180, 0
        %1188 = vmatprep.subr.bf16.mxu0 0
        %1189 = vmatpush1.bf16.msra.mxu0 %v1183
        %1190 = vmatprep.subr.bf16.mxu0 0
        %1191 = vmatpush1.bf16.msra.mxu0 0
        %1192 = vmatprep.subr.bf16.mxu0 0
        %1193 = vmatpush1.bf16.msra.mxu0 0
        %1194 = vmatprep.subr.bf16.mxu0 0
        %1195 = vmatpush1.bf16.msra.mxu0 0
        %1196 = vmatprep.subr.bf16.mxu0 0
        %1197 = vmatpush1.bf16.msra.mxu0 0
        %1198 = vmatprep.subr.bf16.mxu0 0
        %1199 = vmatpush1.bf16.msra.mxu0 0
        %1200 = vmatprep.subr.bf16.mxu0 0
        %1201 = vmatpush1.bf16.msra.mxu0 0
        %1202 = vmatprep.subr.bf16.mxu0 0
        %1203 = vmatpush1.bf16.msra.mxu0 0
        %1204 = vmatprep.subr.bf16.mxu0 0
        %1205 = vmatpush1.bf16.msra.mxu0 0
        %1206 = vmatprep.subr.bf16.mxu0 0
        %1207 = vmatpush1.bf16.msra.mxu0 0
        %1208 = vmatprep.subr.bf16.mxu0 0
        %1209 = vmatpush1.bf16.msra.mxu0 0
        %1210 = vmatprep.subr.bf16.mxu0 0
        %1211 = vmatpush1.bf16.msra.mxu0 0
        %1212 = vmatprep.subr.bf16.mxu0 0
        %1213 = vmatpush1.bf16.msra.mxu0 0
        %1214 = vmatprep.subr.bf16.mxu0 0
        %1215 = vmatpush1.bf16.msra.mxu0 0
        %1216 = vmatprep.subr.bf16.mxu0 0
        %1217 = vmatpush1.bf16.msra.mxu0 0
        %1218 = vmatprep.subr.bf16.mxu0 0
        %1219 = vmatpush1.bf16.msra.mxu0 0
        %1220 = vmatprep.mubr.bf16.mxu0 0
        %1221 = vmatmul.mubr.bf16.gmra.mrb[0].mxu0 %v1186
        %v1222 = vpop.f32.mrb[0].mxu0
        %v1223 = vadd.f32 0.0, %v1222
        %v1224 = vpop.f32.mrb[0].mxu0
        %v1225 = vpop.f32.mrb[0].mxu0
        %v1226 = vadd.f32 0.0, %v1225
        %v1227 = vpop.f32.mrb[0].mxu0
        %1228 = vdwg.mxu0
        %1229 = vrot.lane.b32.xlu0 %v986, 64
        %v1230 = vpop.permute.xlu0 %1229
        %1231 = vrot.lane.b32.xlu0 %v987, 64
        %v1232 = vpop.permute.xlu0 %1231
        %v1234 = vsel %vm989, %v1230, 0
        %v1237 = vsel %vm989, %v1232, 0
        %1239 = vmatprep.subr.bf16.mxu0 0
        %1240 = vmatpush1.bf16.xpose.msra.mxu0 %v1237
        %1241 = vmatprep.subr.bf16.mxu0 0
        %1242 = vmatpush1.bf16.xpose.msra.mxu0 0
        %1243 = vmatprep.subr.bf16.mxu0 0
        %1244 = vmatpush1.bf16.xpose.msra.mxu0 0
        %1245 = vmatprep.subr.bf16.mxu0 0
        %1246 = vmatpush1.bf16.xpose.msra.mxu0 0
        %1247 = vmatprep.subr.bf16.mxu0 0
        %1248 = vmatpush1.bf16.xpose.msra.mxu0 0
        %1249 = vmatprep.subr.bf16.mxu0 0
        %1250 = vmatpush1.bf16.xpose.msra.mxu0 0
        %1251 = vmatprep.subr.bf16.mxu0 0
        %1252 = vmatpush1.bf16.xpose.msra.mxu0 0
        %1253 = vmatprep.subr.bf16.mxu0 0
        %1254 = vmatpush1.bf16.xpose.msra.mxu0 0
        %1255 = vmatprep.subr.bf16.mxu0 0
        %1256 = vmatpush1.bf16.xpose.msra.mxu0 0
        %1257 = vmatprep.subr.bf16.mxu0 0
        %1258 = vmatpush1.bf16.xpose.msra.mxu0 0
        %1259 = vmatprep.subr.bf16.mxu0 0
        %1260 = vmatpush1.bf16.xpose.msra.mxu0 0
        %1261 = vmatprep.subr.bf16.mxu0 0
        %1262 = vmatpush1.bf16.xpose.msra.mxu0 0
        %1263 = vmatprep.subr.bf16.mxu0 0
        %1264 = vmatpush1.bf16.xpose.msra.mxu0 0
        %1265 = vmatprep.subr.bf16.mxu0 0
        %1266 = vmatpush1.bf16.xpose.msra.mxu0 0
        %1267 = vmatprep.subr.bf16.mxu0 0
        %1268 = vmatpush1.bf16.xpose.msra.mxu0 0
        %1269 = vmatprep.subr.bf16.mxu0 0
        %1270 = vmatpush1.bf16.xpose.msra.mxu0 0
        %1271 = vmatprep.mubr.bf16.mxu0 0
        %1272 = vmatmul.mubr.bf16.gmra.mrb[0].mxu0 %v1234
        %v1273 = vpop.f32.mrb[0].mxu0
        %v1274 = vadd.f32 %v720, %v1273
        %v1275 = vpop.f32.mrb[0].mxu0
        %v1276 = vpop.f32.mrb[0].mxu0
        %v1277 = vadd.f32 %v721, %v1276
        %v1278 = vpop.f32.mrb[0].mxu0
        %1279 = vdwg.mxu0
        %v1280 = vsel %vm1037, %v1274, -inf
        %1281 = vmax.xlane.f32.xlu0 %v1280
        %v1282 = vpop.xlane.xlu0 %1281
        %v1283 = vsel %vm1037, %v1277, -inf
        %1284 = vmax.xlane.f32.xlu0 %v1283
        %v1285 = vpop.xlane.xlu0 %1284
        %v1286 = vsub.f32 %v1274, %v1282
        %v1287 = vsub.f32 %v1277, %v1285
        %v1288 = vmul.f32 %v1286, 1.442695
        %v1289 = vpow.pop %v1288
        %v1290 = vmul.f32 %v1287, 1.442695
        %v1291 = vpow.pop %v1290
        %v1292 = vsel %vm1037, %v1289, 0.0
        %1293 = vadd.xlane.f32.xlu0 %v1292
        %v1294 = vpop.xlane.xlu0 %1293
        %v1295 = vsel %vm1037, %v1291, 0.0
        %1296 = vadd.xlane.f32.xlu0 %v1295
        %v1297 = vpop.xlane.xlu0 %1296
        %v1298 = vrcp.pop %v1294
        %v1299 = vrcp.pop %v1297
        %v1300 = vmul.f32 %v1289, %v1298
        %v1301 = vmul.f32 %v1291, %v1299
        %v1302 = vpack.c.bf16 %v1301, %v1300
        %1303 = vrot.lane.b32.xlu0 %v988, 64
        %v1304 = vpop.permute.xlu0 %1303
        %v1307 = vsel %vm1037, %v1302, 0
        %1309 = vmatprep.subr.bf16.mxu0 0
        %1310 = vmatpush1.bf16.msra.mxu0 %v1304
        %1311 = vmatprep.subr.bf16.mxu0 0
        %1312 = vmatpush1.bf16.msra.mxu0 0
        %1313 = vmatprep.subr.bf16.mxu0 0
        %1314 = vmatpush1.bf16.msra.mxu0 0
        %1315 = vmatprep.subr.bf16.mxu0 0
        %1316 = vmatpush1.bf16.msra.mxu0 0
        %1317 = vmatprep.subr.bf16.mxu0 0
        %1318 = vmatpush1.bf16.msra.mxu0 0
        %1319 = vmatprep.subr.bf16.mxu0 0
        %1320 = vmatpush1.bf16.msra.mxu0 0
        %1321 = vmatprep.subr.bf16.mxu0 0
        %1322 = vmatpush1.bf16.msra.mxu0 0
        %1323 = vmatprep.subr.bf16.mxu0 0
        %1324 = vmatpush1.bf16.msra.mxu0 0
        %1325 = vmatprep.subr.bf16.mxu0 0
        %1326 = vmatpush1.bf16.msra.mxu0 0
        %1327 = vmatprep.subr.bf16.mxu0 0
        %1328 = vmatpush1.bf16.msra.mxu0 0
        %1329 = vmatprep.subr.bf16.mxu0 0
        %1330 = vmatpush1.bf16.msra.mxu0 0
        %1331 = vmatprep.subr.bf16.mxu0 0
        %1332 = vmatpush1.bf16.msra.mxu0 0
        %1333 = vmatprep.subr.bf16.mxu0 0
        %1334 = vmatpush1.bf16.msra.mxu0 0
        %1335 = vmatprep.subr.bf16.mxu0 0
        %1336 = vmatpush1.bf16.msra.mxu0 0
        %1337 = vmatprep.subr.bf16.mxu0 0
        %1338 = vmatpush1.bf16.msra.mxu0 0
        %1339 = vmatprep.subr.bf16.mxu0 0
        %1340 = vmatpush1.bf16.msra.mxu0 0
        %1341 = vmatprep.mubr.bf16.mxu0 0
        %1342 = vmatmul.mubr.bf16.gmra.mrb[0].mxu0 %v1307
        %v1343 = vpop.f32.mrb[0].mxu0
        %v1344 = vadd.f32 0.0, %v1343
        %v1345 = vpop.f32.mrb[0].mxu0
        %v1346 = vpop.f32.mrb[0].mxu0
        %v1347 = vadd.f32 0.0, %v1346
        %v1348 = vpop.f32.mrb[0].mxu0
        %1349 = vdwg.mxu0
        %1350 = vrot.lane.b32.xlu0 %v986, 32
        %v1351 = vpop.permute.xlu0 %1350
        %1352 = vrot.lane.b32.xlu0 %v987, 32
        %v1353 = vpop.permute.xlu0 %1352
        %v1355 = vsel %vm989, %v1351, 0
        %v1358 = vsel %vm989, %v1353, 0
        %1360 = vmatprep.subr.bf16.mxu0 0
        %1361 = vmatpush1.bf16.xpose.msra.mxu0 %v1358
        %1362 = vmatprep.subr.bf16.mxu0 0
        %1363 = vmatpush1.bf16.xpose.msra.mxu0 0
        %1364 = vmatprep.subr.bf16.mxu0 0
        %1365 = vmatpush1.bf16.xpose.msra.mxu0 0
        %1366 = vmatprep.subr.bf16.mxu0 0
        %1367 = vmatpush1.bf16.xpose.msra.mxu0 0
        %1368 = vmatprep.subr.bf16.mxu0 0
        %1369 = vmatpush1.bf16.xpose.msra.mxu0 0
        %1370 = vmatprep.subr.bf16.mxu0 0
        %1371 = vmatpush1.bf16.xpose.msra.mxu0 0
        %1372 = vmatprep.subr.bf16.mxu0 0
        %1373 = vmatpush1.bf16.xpose.msra.mxu0 0
        %1374 = vmatprep.subr.bf16.mxu0 0
        %1375 = vmatpush1.bf16.xpose.msra.mxu0 0
        %1376 = vmatprep.subr.bf16.mxu0 0
        %1377 = vmatpush1.bf16.xpose.msra.mxu0 0
        %1378 = vmatprep.subr.bf16.mxu0 0
        %1379 = vmatpush1.bf16.xpose.msra.mxu0 0
        %1380 = vmatprep.subr.bf16.mxu0 0
        %1381 = vmatpush1.bf16.xpose.msra.mxu0 0
        %1382 = vmatprep.subr.bf16.mxu0 0
        %1383 = vmatpush1.bf16.xpose.msra.mxu0 0
        %1384 = vmatprep.subr.bf16.mxu0 0
        %1385 = vmatpush1.bf16.xpose.msra.mxu0 0
        %1386 = vmatprep.subr.bf16.mxu0 0
        %1387 = vmatpush1.bf16.xpose.msra.mxu0 0
        %1388 = vmatprep.subr.bf16.mxu0 0
        %1389 = vmatpush1.bf16.xpose.msra.mxu0 0
        %1390 = vmatprep.subr.bf16.mxu0 0
        %1391 = vmatpush1.bf16.xpose.msra.mxu0 0
        %1392 = vmatprep.mubr.bf16.mxu0 0
        %1393 = vmatmul.mubr.bf16.gmra.mrb[0].mxu0 %v1355
        %v1394 = vpop.f32.mrb[0].mxu0
        %v1395 = vadd.f32 %v720, %v1394
        %v1396 = vpop.f32.mrb[0].mxu0
        %v1397 = vpop.f32.mrb[0].mxu0
        %v1398 = vadd.f32 %v721, %v1397
        %v1399 = vpop.f32.mrb[0].mxu0
        %1400 = vdwg.mxu0
        %v1401 = vsel %vm1037, %v1395, -inf
        %1402 = vmax.xlane.f32.xlu0 %v1401
        %v1403 = vpop.xlane.xlu0 %1402
        %v1404 = vsel %vm1037, %v1398, -inf
        %1405 = vmax.xlane.f32.xlu0 %v1404
        %v1406 = vpop.xlane.xlu0 %1405
        %v1407 = vsub.f32 %v1395, %v1403
        %v1408 = vsub.f32 %v1398, %v1406
        %v1409 = vmul.f32 %v1407, 1.442695
        %v1410 = vpow.pop %v1409
        %v1411 = vmul.f32 %v1408, 1.442695
        %v1412 = vpow.pop %v1411
        %v1413 = vsel %vm1037, %v1410, 0.0
        %1414 = vadd.xlane.f32.xlu0 %v1413
        %v1415 = vpop.xlane.xlu0 %1414
        %v1416 = vsel %vm1037, %v1412, 0.0
        %1417 = vadd.xlane.f32.xlu0 %v1416
        %v1418 = vpop.xlane.xlu0 %1417
        %v1419 = vrcp.pop %v1415
        %v1420 = vrcp.pop %v1418
        %v1421 = vmul.f32 %v1410, %v1419
        %v1422 = vmul.f32 %v1412, %v1420
        %v1423 = vpack.c.bf16 %v1422, %v1421
        %1424 = vrot.lane.b32.xlu0 %v988, 32
        %v1425 = vpop.permute.xlu0 %1424
        %v1428 = vsel %vm1037, %v1423, 0
        %1430 = vmatprep.subr.bf16.mxu0 0
        %1431 = vmatpush1.bf16.msra.mxu0 %v1425
        %1432 = vmatprep.subr.bf16.mxu0 0
        %1433 = vmatpush1.bf16.msra.mxu0 0
        %1434 = vmatprep.subr.bf16.mxu0 0
        %1435 = vmatpush1.bf16.msra.mxu0 0
        %1436 = vmatprep.subr.bf16.mxu0 0
        %1437 = vmatpush1.bf16.msra.mxu0 0
        %1438 = vmatprep.subr.bf16.mxu0 0
        %1439 = vmatpush1.bf16.msra.mxu0 0
        %1440 = vmatprep.subr.bf16.mxu0 0
        %1441 = vmatpush1.bf16.msra.mxu0 0
        %1442 = vmatprep.subr.bf16.mxu0 0
        %1443 = vmatpush1.bf16.msra.mxu0 0
        %1444 = vmatprep.subr.bf16.mxu0 0
        %1445 = vmatpush1.bf16.msra.mxu0 0
        %1446 = vmatprep.subr.bf16.mxu0 0
        %1447 = vmatpush1.bf16.msra.mxu0 0
        %1448 = vmatprep.subr.bf16.mxu0 0
        %1449 = vmatpush1.bf16.msra.mxu0 0
        %1450 = vmatprep.subr.bf16.mxu0 0
        %1451 = vmatpush1.bf16.msra.mxu0 0
        %1452 = vmatprep.subr.bf16.mxu0 0
        %1453 = vmatpush1.bf16.msra.mxu0 0
        %1454 = vmatprep.subr.bf16.mxu0 0
        %1455 = vmatpush1.bf16.msra.mxu0 0
        %1456 = vmatprep.subr.bf16.mxu0 0
        %1457 = vmatpush1.bf16.msra.mxu0 0
        %1458 = vmatprep.subr.bf16.mxu0 0
        %1459 = vmatpush1.bf16.msra.mxu0 0
        %1460 = vmatprep.subr.bf16.mxu0 0
        %1461 = vmatpush1.bf16.msra.mxu0 0
        %1462 = vmatprep.mubr.bf16.mxu0 0
        %1463 = vmatmul.mubr.bf16.gmra.mrb[0].mxu0 %v1428
        %v1464 = vpop.f32.mrb[0].mxu0
        %v1465 = vadd.f32 0.0, %v1464
        %v1466 = vpop.f32.mrb[0].mxu0
        %v1467 = vpop.f32.mrb[0].mxu0
        %v1468 = vadd.f32 0.0, %v1467
        %v1469 = vpop.f32.mrb[0].mxu0
        %1470 = vdwg.mxu0
        %1473 = vrot.lane.b32.xlu0 %v1223, 32
        %v1474 = vpop.permute.xlu0 %1473
        %1475 = vrot.lane.b32.xlu0 %v1226, 32
        %v1476 = vpop.permute.xlu0 %1475
        %1481 = vrot.lane.b32.xlu0 %v1344, 64
        %v1482 = vpop.permute.xlu0 %1481
        %1483 = vrot.lane.b32.xlu0 %v1347, 64
        %v1484 = vpop.permute.xlu0 %1483
        %1489 = vrot.lane.b32.xlu0 %v1465, 96
        %v1490 = vpop.permute.xlu0 %1489
        %1491 = vrot.lane.b32.xlu0 %v1468, 96
        %v1492 = vpop.permute.xlu0 %1491
        %v1495 = vsel %vm989, %v1099, %v1474
        %v1496 = vsel %vm989, %v1102, %v1476
        %vm1497 = vcmask 523264
        %v1498 = vsel %vm1497, %v1495, %v1482
        %v1499 = vsel %vm1497, %v1496, %v1484
        %vm1500 = vcmask 785408
        %v1501 = vsel %vm1500, %v1498, %v1490
        %v1502 = vsel %vm1500, %v1499, %v1492
        %v1503 = vpack.c.bf16 %v1502, %v1501
        %v1504 = vld [vmem:[%s583] sm:$0xf]
        %v1505 = vld [vmem:[%s583 + $0x4] sm:$0xf]
        %v1506 = vld [vmem:[%s583 + $0x8] sm:$0xf]
        %v1507 = vld [vmem:[%s583 + $0xc] sm:$0xf]
        %v1508 = vld [vmem:[%s583 + $0x10] sm:$0xf]
        %v1509 = vld [vmem:[%s583 + $0x14] sm:$0xf]
        %v1510 = vld [vmem:[%s583 + $0x18] sm:$0xf]
        %v1511 = vld [vmem:[%s583 + $0x1c] sm:$0xf]
        %v1512 = vld [vmem:[%s583 + $0x20] sm:$0xf]
        %v1513 = vld [vmem:[%s583 + $0x24] sm:$0xf]
        %v1514 = vld [vmem:[%s583 + $0x28] sm:$0xf]
        %v1515 = vld [vmem:[%s583 + $0x2c] sm:$0xf]
        %v1516 = vld [vmem:[%s583 + $0x30] sm:$0xf]
        %v1517 = vld [vmem:[%s583 + $0x34] sm:$0xf]
        %v1518 = vld [vmem:[%s583 + $0x38] sm:$0xf]
        %v1519 = vld [vmem:[%s583 + $0x3c] sm:$0xf]
        %v1520 = vld [vmem:[%s686] sm:$0x1]
        %v1522 = vlaneseq
        %v1523 = vshrl.u32 %v1522, 7
        %v1524 = vsub.s32 0, %v1523
        %v1525 = vrot.slane %v1520, %v1524
        %v1543 = vunpack.c.l.b16 %v1504
        %v1544 = vunpack.c.l.b16 %v1505
        %v1545 = vunpack.c.l.b16 %v1506
        %v1546 = vunpack.c.l.b16 %v1507
        %v1547 = vunpack.c.l.b16 %v1508
        %v1548 = vunpack.c.l.b16 %v1509
        %v1549 = vunpack.c.l.b16 %v1510
        %v1550 = vunpack.c.l.b16 %v1511
        %v1551 = vunpack.c.l.b16 %v1512
        %v1552 = vunpack.c.l.b16 %v1513
        %v1553 = vunpack.c.l.b16 %v1514
        %v1554 = vunpack.c.l.b16 %v1515
        %v1555 = vunpack.c.l.b16 %v1516
        %v1556 = vunpack.c.l.b16 %v1517
        %v1557 = vunpack.c.l.b16 %v1518
        %v1558 = vunpack.c.l.b16 %v1519
        %v1559 = vpack.c.b16 %v1544, %v1543
        %v1560 = vpack.c.b16 %v1546, %v1545
        %v1561 = vpack.c.b16 %v1548, %v1547
        %v1562 = vpack.c.b16 %v1550, %v1549
        %v1563 = vpack.c.b16 %v1552, %v1551
        %v1564 = vpack.c.b16 %v1554, %v1553
        %v1565 = vpack.c.b16 %v1556, %v1555
        %v1566 = vpack.c.b16 %v1558, %v1557
        %1575 = vmatprep.subr.bf16.mxu0 0
        %1576 = vmatpush1.bf16.msra.mxu0 %v1559
        %1577 = vmatprep.subr.bf16.mxu0 0
        %1578 = vmatpush1.bf16.msra.mxu0 %v1560
        %1579 = vmatprep.subr.bf16.mxu0 0
        %1580 = vmatpush1.bf16.msra.mxu0 %v1561
        %1581 = vmatprep.subr.bf16.mxu0 0
        %1582 = vmatpush1.bf16.msra.mxu0 %v1562
        %1583 = vmatprep.subr.bf16.mxu0 0
        %1584 = vmatpush1.bf16.msra.mxu0 %v1563
        %1585 = vmatprep.subr.bf16.mxu0 0
        %1586 = vmatpush1.bf16.msra.mxu0 %v1564
        %1587 = vmatprep.subr.bf16.mxu0 0
        %1588 = vmatpush1.bf16.msra.mxu0 %v1565
        %1589 = vmatprep.subr.bf16.mxu0 0
        %1590 = vmatpush1.bf16.msra.mxu0 %v1566
        %1591 = vmatprep.subr.bf16.mxu0 0
        %1592 = vmatpush1.bf16.msra.mxu0 0
        %1593 = vmatprep.subr.bf16.mxu0 0
        %1594 = vmatpush1.bf16.msra.mxu0 0
        %1595 = vmatprep.subr.bf16.mxu0 0
        %1596 = vmatpush1.bf16.msra.mxu0 0
        %1597 = vmatprep.subr.bf16.mxu0 0
        %1598 = vmatpush1.bf16.msra.mxu0 0
        %1599 = vmatprep.subr.bf16.mxu0 0
        %1600 = vmatpush1.bf16.msra.mxu0 0
        %1601 = vmatprep.subr.bf16.mxu0 0
        %1602 = vmatpush1.bf16.msra.mxu0 0
        %1603 = vmatprep.subr.bf16.mxu0 0
        %1604 = vmatpush1.bf16.msra.mxu0 0
        %1605 = vmatprep.subr.bf16.mxu0 0
        %1606 = vmatpush1.bf16.msra.mxu0 0
        %1607 = vmatprep.mubr.bf16.mxu0 0
        %1608 = vmatmul.mubr.bf16.gmra.mrb[0].mxu0 %v1503
        %v1609 = vpop.f32.mrb[0].mxu0
        %v1610 = vadd.f32 %v1525, %v1609
        %v1611 = vpop.f32.mrb[0].mxu0
        %v1612 = vpop.f32.mrb[0].mxu0
        %v1613 = vadd.f32 %v1525, %v1612
        %v1614 = vpop.f32.mrb[0].mxu0
        %1615 = vdwg.mxu0
        %v1616 = vld [vmem:[%s10] sm:$0x1]
        %v1617 = vld [vmem:[%s11] sm:$0x1]
        %v1618 = vadd.f32 %v703, %v1610
        %v1619 = vadd.f32 %v704, %v1613
        %1620 = vadd.xlane.f32.xlu0 %v1618
        %v1621 = vpop.xlane.xlu0 %1620
        %1622 = vadd.xlane.f32.xlu0 %v1619
        %v1623 = vpop.xlane.xlu0 %1622
        %v1624 = vrcp.pop 128.0
        %v1625 = vmul.f32 %v1621, %v1624
        %v1626 = vmul.f32 %v1623, %v1624
        %v1627 = vsub.f32 %v1618, %v1625
        %v1628 = vsub.f32 %v1619, %v1626
        %v1629 = vmul.f32 %v1627, %v1627
        %v1630 = vmul.f32 %v1628, %v1628
        %1631 = vadd.xlane.f32.xlu0 %v1629
        %v1632 = vpop.xlane.xlu0 %1631
        %1633 = vadd.xlane.f32.xlu0 %v1630
        %v1634 = vpop.xlane.xlu0 %1633
        %v1635 = vmul.f32 %v1632, %v1624
        %v1636 = vmul.f32 %v1634, %v1624
        %v1637 = vadd.f32 %v1635, 1e-05
        %v1638 = vadd.f32 %v1636, 1e-05
        %v1639 = vrsqrt.pop %v1637
        %v1640 = vrsqrt.pop %v1638
        %v1641 = vmul.f32 %v1627, %v1639
        %v1642 = vmul.f32 %v1628, %v1640
        %v1644 = vlaneseq
        %v1645 = vshrl.u32 %v1644, 7
        %v1646 = vsub.s32 0, %v1645
        %v1647 = vrot.slane %v1616, %v1646
        %v1649 = vmul.f32 %v1641, %v1647
        %v1650 = vmul.f32 %v1642, %v1647
        %v1652 = vlaneseq
        %v1653 = vshrl.u32 %v1652, 7
        %v1654 = vsub.s32 0, %v1653
        %v1655 = vrot.slane %v1617, %v1654
        %v1657 = vadd.f32 %v1649, %v1655
        %v1658 = vadd.f32 %v1650, %v1655
        %v1659 = vpack.c.bf16 %v1658, %v1657
        %v1660 = vld [vmem:[%s592] sm:$0xff]
        %v1661 = vld [vmem:[%s592 + $0x8] sm:$0xff]
        %v1662 = vld [vmem:[%s592 + $0x10] sm:$0xff]
        %v1663 = vld [vmem:[%s592 + $0x18] sm:$0xff]
        %v1664 = vld [vmem:[%s592 + $0x20] sm:$0xff]
        %v1665 = vld [vmem:[%s592 + $0x28] sm:$0xff]
        %v1666 = vld [vmem:[%s592 + $0x30] sm:$0xff]
        %v1667 = vld [vmem:[%s592 + $0x38] sm:$0xff]
        %v1668 = vld [vmem:[%s592 + $0x40] sm:$0xff]
        %v1669 = vld [vmem:[%s592 + $0x48] sm:$0xff]
        %v1670 = vld [vmem:[%s592 + $0x50] sm:$0xff]
        %v1671 = vld [vmem:[%s592 + $0x58] sm:$0xff]
        %v1672 = vld [vmem:[%s592 + $0x60] sm:$0xff]
        %v1673 = vld [vmem:[%s592 + $0x68] sm:$0xff]
        %v1674 = vld [vmem:[%s592 + $0x70] sm:$0xff]
        %v1675 = vld [vmem:[%s592 + $0x78] sm:$0xff]
        %v1676 = vld [vmem:[%s690] sm:$0x3]
        %v1678 = vlaneseq
        %v1679 = vshrl.u32 %v1678, 7
        %v1680 = vsub.s32 0, %v1679
        %v1681 = vrot.slane %v1676, %v1680
        %v1682 = vlaneseq
        %v1683 = vshrl.u32 %v1682, 7
        %v1684 = vsub.s32 1, %v1683
        %v1685 = vrot.slane %v1676, %v1684
        %v1704 = vunpack.c.l.b16 %v1660
        %v1705 = vunpack.c.h.b16 %v1660
        %v1706 = vunpack.c.l.b16 %v1661
        %v1707 = vunpack.c.h.b16 %v1661
        %v1708 = vunpack.c.l.b16 %v1662
        %v1709 = vunpack.c.h.b16 %v1662
        %v1710 = vunpack.c.l.b16 %v1663
        %v1711 = vunpack.c.h.b16 %v1663
        %v1712 = vunpack.c.l.b16 %v1664
        %v1713 = vunpack.c.h.b16 %v1664
        %v1714 = vunpack.c.l.b16 %v1665
        %v1715 = vunpack.c.h.b16 %v1665
        %v1716 = vunpack.c.l.b16 %v1666
        %v1717 = vunpack.c.h.b16 %v1666
        %v1718 = vunpack.c.l.b16 %v1667
        %v1719 = vunpack.c.h.b16 %v1667
        %v1720 = vunpack.c.l.b16 %v1668
        %v1721 = vunpack.c.h.b16 %v1668
        %v1722 = vunpack.c.l.b16 %v1669
        %v1723 = vunpack.c.h.b16 %v1669
        %v1724 = vunpack.c.l.b16 %v1670
        %v1725 = vunpack.c.h.b16 %v1670
        %v1726 = vunpack.c.l.b16 %v1671
        %v1727 = vunpack.c.h.b16 %v1671
        %v1728 = vunpack.c.l.b16 %v1672
        %v1729 = vunpack.c.h.b16 %v1672
        %v1730 = vunpack.c.l.b16 %v1673
        %v1731 = vunpack.c.h.b16 %v1673
        %v1732 = vunpack.c.l.b16 %v1674
        %v1733 = vunpack.c.h.b16 %v1674
        %v1734 = vunpack.c.l.b16 %v1675
        %v1735 = vunpack.c.h.b16 %v1675
        %v1736 = vpack.c.b16 %v1706, %v1704
        %v1737 = vpack.c.b16 %v1707, %v1705
        %v1738 = vpack.c.b16 %v1710, %v1708
        %v1739 = vpack.c.b16 %v1711, %v1709
        %v1740 = vpack.c.b16 %v1714, %v1712
        %v1741 = vpack.c.b16 %v1715, %v1713
        %v1742 = vpack.c.b16 %v1718, %v1716
        %v1743 = vpack.c.b16 %v1719, %v1717
        %v1744 = vpack.c.b16 %v1722, %v1720
        %v1745 = vpack.c.b16 %v1723, %v1721
        %v1746 = vpack.c.b16 %v1726, %v1724
        %v1747 = vpack.c.b16 %v1727, %v1725
        %v1748 = vpack.c.b16 %v1730, %v1728
        %v1749 = vpack.c.b16 %v1731, %v1729
        %v1750 = vpack.c.b16 %v1734, %v1732
        %v1751 = vpack.c.b16 %v1735, %v1733
        %1768 = vmatprep.subr.bf16.mxu0 %v1737
        %1769 = vmatpush1.bf16.msra.mxu0 %v1736
        %1770 = vmatprep.subr.bf16.mxu0 %v1739
        %1771 = vmatpush1.bf16.msra.mxu0 %v1738
        %1772 = vmatprep.subr.bf16.mxu0 %v1741
        %1773 = vmatpush1.bf16.msra.mxu0 %v1740
        %1774 = vmatprep.subr.bf16.mxu0 %v1743
        %1775 = vmatpush1.bf16.msra.mxu0 %v1742
        %1776 = vmatprep.subr.bf16.mxu0 %v1745
        %1777 = vmatpush1.bf16.msra.mxu0 %v1744
        %1778 = vmatprep.subr.bf16.mxu0 %v1747
        %1779 = vmatpush1.bf16.msra.mxu0 %v1746
        %1780 = vmatprep.subr.bf16.mxu0 %v1749
        %1781 = vmatpush1.bf16.msra.mxu0 %v1748
        %1782 = vmatprep.subr.bf16.mxu0 %v1751
        %1783 = vmatpush1.bf16.msra.mxu0 %v1750
        %1784 = vmatprep.subr.bf16.mxu0 0
        %1785 = vmatpush1.bf16.msra.mxu0 0
        %1786 = vmatprep.subr.bf16.mxu0 0
        %1787 = vmatpush1.bf16.msra.mxu0 0
        %1788 = vmatprep.subr.bf16.mxu0 0
        %1789 = vmatpush1.bf16.msra.mxu0 0
        %1790 = vmatprep.subr.bf16.mxu0 0
        %1791 = vmatpush1.bf16.msra.mxu0 0
        %1792 = vmatprep.subr.bf16.mxu0 0
        %1793 = vmatpush1.bf16.msra.mxu0 0
        %1794 = vmatprep.subr.bf16.mxu0 0
        %1795 = vmatpush1.bf16.msra.mxu0 0
        %1796 = vmatprep.subr.bf16.mxu0 0
        %1797 = vmatpush1.bf16.msra.mxu0 0
        %1798 = vmatprep.subr.bf16.mxu0 0
        %1799 = vmatpush1.bf16.msra.mxu0 0
        %1800 = vmatprep.mubr.bf16.mxu0 0
        %1801 = vmatmul.mubr.bf16.gmra.mrb[0].mxu0 %v1659
        %v1802 = vpop.f32.mrb[0].mxu0
        %v1803 = vadd.f32 %v1681, %v1802
        %v1804 = vpop.f32.mrb[0].mxu0
        %v1805 = vadd.f32 %v1685, %v1804
        %v1806 = vpop.f32.mrb[0].mxu0
        %v1807 = vadd.f32 %v1681, %v1806
        %v1808 = vpop.f32.mrb[0].mxu0
        %v1809 = vadd.f32 %v1685, %v1808
        %1810 = vdwg.mxu0
        %v1811 = vmax.f32 %v1803, 0.0
        %v1812 = vmax.f32 %v1805, 0.0
        %v1813 = vmax.f32 %v1807, 0.0
        %v1814 = vmax.f32 %v1809, 0.0
        %v1815 = vpack.c.bf16 %v1813, %v1811
        %v1816 = vpack.c.bf16 %v1814, %v1812
        %v1817 = vld [vmem:[%s601] sm:$0xf]
        %v1818 = vld [vmem:[%s601 + $0x4] sm:$0xf]
        %v1819 = vld [vmem:[%s601 + $0x8] sm:$0xf]
        %v1820 = vld [vmem:[%s601 + $0xc] sm:$0xf]
        %v1821 = vld [vmem:[%s601 + $0x10] sm:$0xf]
        %v1822 = vld [vmem:[%s601 + $0x14] sm:$0xf]
        %v1823 = vld [vmem:[%s601 + $0x18] sm:$0xf]
        %v1824 = vld [vmem:[%s601 + $0x1c] sm:$0xf]
        %v1825 = vld [vmem:[%s601 + $0x20] sm:$0xf]
        %v1826 = vld [vmem:[%s601 + $0x24] sm:$0xf]
        %v1827 = vld [vmem:[%s601 + $0x28] sm:$0xf]
        %v1828 = vld [vmem:[%s601 + $0x2c] sm:$0xf]
        %v1829 = vld [vmem:[%s601 + $0x30] sm:$0xf]
        %v1830 = vld [vmem:[%s601 + $0x34] sm:$0xf]
        %v1831 = vld [vmem:[%s601 + $0x38] sm:$0xf]
        %v1832 = vld [vmem:[%s601 + $0x3c] sm:$0xf]
        %v1833 = vld [vmem:[%s601 + $0x40] sm:$0xf]
        %v1834 = vld [vmem:[%s601 + $0x44] sm:$0xf]
        %v1835 = vld [vmem:[%s601 + $0x48] sm:$0xf]
        %v1836 = vld [vmem:[%s601 + $0x4c] sm:$0xf]
        %v1837 = vld [vmem:[%s601 + $0x50] sm:$0xf]
        %v1838 = vld [vmem:[%s601 + $0x54] sm:$0xf]
        %v1839 = vld [vmem:[%s601 + $0x58] sm:$0xf]
        %v1840 = vld [vmem:[%s601 + $0x5c] sm:$0xf]
        %v1841 = vld [vmem:[%s601 + $0x60] sm:$0xf]
        %v1842 = vld [vmem:[%s601 + $0x64] sm:$0xf]
        %v1843 = vld [vmem:[%s601 + $0x68] sm:$0xf]
        %v1844 = vld [vmem:[%s601 + $0x6c] sm:$0xf]
        %v1845 = vld [vmem:[%s601 + $0x70] sm:$0xf]
        %v1846 = vld [vmem:[%s601 + $0x74] sm:$0xf]
        %v1847 = vld [vmem:[%s601 + $0x78] sm:$0xf]
        %v1848 = vld [vmem:[%s601 + $0x7c] sm:$0xf]
        %v1849 = vld [vmem:[%s693] sm:$0x1]
        %v1851 = vlaneseq
        %v1852 = vshrl.u32 %v1851, 7
        %v1853 = vsub.s32 0, %v1852
        %v1854 = vrot.slane %v1849, %v1853
        %v1888 = vunpack.c.l.b16 %v1817
        %v1889 = vunpack.c.l.b16 %v1818
        %v1890 = vunpack.c.l.b16 %v1819
        %v1891 = vunpack.c.l.b16 %v1820
        %v1892 = vunpack.c.l.b16 %v1821
        %v1893 = vunpack.c.l.b16 %v1822
        %v1894 = vunpack.c.l.b16 %v1823
        %v1895 = vunpack.c.l.b16 %v1824
        %v1896 = vunpack.c.l.b16 %v1825
        %v1897 = vunpack.c.l.b16 %v1826
        %v1898 = vunpack.c.l.b16 %v1827
        %v1899 = vunpack.c.l.b16 %v1828
        %v1900 = vunpack.c.l.b16 %v1829
        %v1901 = vunpack.c.l.b16 %v1830
        %v1902 = vunpack.c.l.b16 %v1831
        %v1903 = vunpack.c.l.b16 %v1832
        %v1904 = vunpack.c.l.b16 %v1833
        %v1905 = vunpack.c.l.b16 %v1834
        %v1906 = vunpack.c.l.b16 %v1835
        %v1907 = vunpack.c.l.b16 %v1836
        %v1908 = vunpack.c.l.b16 %v1837
        %v1909 = vunpack.c.l.b16 %v1838
        %v1910 = vunpack.c.l.b16 %v1839
        %v1911 = vunpack.c.l.b16 %v1840
        %v1912 = vunpack.c.l.b16 %v1841
        %v1913 = vunpack.c.l.b16 %v1842
        %v1914 = vunpack.c.l.b16 %v1843
        %v1915 = vunpack.c.l.b16 %v1844
        %v1916 = vunpack.c.l.b16 %v1845
        %v1917 = vunpack.c.l.b16 %v1846
        %v1918 = vunpack.c.l.b16 %v1847
        %v1919 = vunpack.c.l.b16 %v1848
        %v1920 = vpack.c.b16 %v1889, %v1888
        %v1921 = vpack.c.b16 %v1891, %v1890
        %v1922 = vpack.c.b16 %v1893, %v1892
        %v1923 = vpack.c.b16 %v1895, %v1894
        %v1924 = vpack.c.b16 %v1897, %v1896
        %v1925 = vpack.c.b16 %v1899, %v1898
        %v1926 = vpack.c.b16 %v1901, %v1900
        %v1927 = vpack.c.b16 %v1903, %v1902
        %v1928 = vpack.c.b16 %v1905, %v1904
        %v1929 = vpack.c.b16 %v1907, %v1906
        %v1930 = vpack.c.b16 %v1909, %v1908
        %v1931 = vpack.c.b16 %v1911, %v1910
        %v1932 = vpack.c.b16 %v1913, %v1912
        %v1933 = vpack.c.b16 %v1915, %v1914
        %v1934 = vpack.c.b16 %v1917, %v1916
        %v1935 = vpack.c.b16 %v1919, %v1918
        %1952 = vmatprep.subr.bf16.mxu0 0
        %1953 = vmatpush1.bf16.msra.mxu0 %v1920
        %1954 = vmatprep.subr.bf16.mxu0 0
        %1955 = vmatpush1.bf16.msra.mxu0 %v1921
        %1956 = vmatprep.subr.bf16.mxu0 0
        %1957 = vmatpush1.bf16.msra.mxu0 %v1922
        %1958 = vmatprep.subr.bf16.mxu0 0
        %1959 = vmatpush1.bf16.msra.mxu0 %v1923
        %1960 = vmatprep.subr.bf16.mxu0 0
        %1961 = vmatpush1.bf16.msra.mxu0 %v1924
        %1962 = vmatprep.subr.bf16.mxu0 0
        %1963 = vmatpush1.bf16.msra.mxu0 %v1925
        %1964 = vmatprep.subr.bf16.mxu0 0
        %1965 = vmatpush1.bf16.msra.mxu0 %v1926
        %1966 = vmatprep.subr.bf16.mxu0 0
        %1967 = vmatpush1.bf16.msra.mxu0 %v1927
        %1968 = vmatprep.subr.bf16.mxu0 0
        %1969 = vmatpush1.bf16.msra.mxu0 %v1928
        %1970 = vmatprep.subr.bf16.mxu0 0
        %1971 = vmatpush1.bf16.msra.mxu0 %v1929
        %1972 = vmatprep.subr.bf16.mxu0 0
        %1973 = vmatpush1.bf16.msra.mxu0 %v1930
        %1974 = vmatprep.subr.bf16.mxu0 0
        %1975 = vmatpush1.bf16.msra.mxu0 %v1931
        %1976 = vmatprep.subr.bf16.mxu0 0
        %1977 = vmatpush1.bf16.msra.mxu0 %v1932
        %1978 = vmatprep.subr.bf16.mxu0 0
        %1979 = vmatpush1.bf16.msra.mxu0 %v1933
        %1980 = vmatprep.subr.bf16.mxu0 0
        %1981 = vmatpush1.bf16.msra.mxu0 %v1934
        %1982 = vmatprep.subr.bf16.mxu0 0
        %1983 = vmatpush1.bf16.msra.mxu0 %v1935
        %1984 = vmatprep.mubr.bf16.mxu0 %v1816
        %1985 = vmatmul.mubr.bf16.gmra.mrb[0].mxu0 %v1815
        %v1986 = vpop.f32.mrb[0].mxu0
        %v1987 = vadd.f32 %v1854, %v1986
        %v1988 = vpop.f32.mrb[0].mxu0
        %v1989 = vpop.f32.mrb[0].mxu0
        %v1990 = vadd.f32 %v1854, %v1989
        %v1991 = vpop.f32.mrb[0].mxu0
        %1992 = vdwg.mxu0
        %v1993 = vadd.f32 %v1987, %v1657
        %v1994 = vadd.f32 %v1990, %v1658
        %1995 = vadd.xlane.f32.xlu0 %v1993
        %v1996 = vpop.xlane.xlu0 %1995
        %1997 = vadd.xlane.f32.xlu0 %v1994
        %v1998 = vpop.xlane.xlu0 %1997
        %v1999 = vmul.f32 %v1996, %v1624
        %v2000 = vmul.f32 %v1998, %v1624
        %v2001 = vsub.f32 %v1993, %v1999
        %v2002 = vsub.f32 %v1994, %v2000
        %v2003 = vmul.f32 %v2001, %v2001
        %v2004 = vmul.f32 %v2002, %v2002
        %2005 = vadd.xlane.f32.xlu0 %v2003
        %v2006 = vpop.xlane.xlu0 %2005
        %2007 = vadd.xlane.f32.xlu0 %v2004
        %v2008 = vpop.xlane.xlu0 %2007
        %v2009 = vmul.f32 %v2006, %v1624
        %v2010 = vmul.f32 %v2008, %v1624
        %v2011 = vadd.f32 %v2009, 1e-05
        %v2012 = vadd.f32 %v2010, 1e-05
        %v2013 = vrsqrt.pop %v2011
        %v2014 = vrsqrt.pop %v2012
        %v2015 = vmul.f32 %v2001, %v2013
        %v2016 = vmul.f32 %v2002, %v2014
        %v2017 = vmul.f32 %v2015, %v1647
        %v2018 = vmul.f32 %v2016, %v1647
        %v2019 = vadd.f32 %v2017, %v1655
        %v2020 = vadd.f32 %v2018, %v1655
        %2021 = vst [vmem:[#allocation2] sm:$0xff] %v2019
        %2022 = vst [vmem:[#allocation2 + $0x8] sm:$0xff] %v2020
        %p2023 = scmp.eq.s32.totalorder %s43, 1
        // Predicated region
        $region97: #{tpu_custom_call.1} parent=67 // pred_check
          %p2024 = pneg %p2023
        $region98: #{tpu_custom_call.1} parent=67 // pred_check_branch
          %2026 = sbr.rel (%p2024) target = $region100
        $region99: #{tpu_custom_call.1} parent=67 // pred_region
          %2027 = vst [vmem:[%s679] sm:$0xff] %v2019
          %2028 = vst [vmem:[%s679 + $0x8] sm:$0xff] %v2020
        $region100: #{tpu_custom_call.1} parent=67 // pred_fallthru
          _
        %s2029 = sand.u32 %s360, 1
        %s2030 = scalar_lea.sflag [#allocation5], %s2029
        %s2031 = sand.u32 %s360, 1
        %s2032 = smul.addr %s2031, 16
        %s2033 = scalar_lea.vmem [#allocation14], %s2032
        // Predicated region
        $region101: #{tpu_custom_call.1} parent=67 // pred_check
          %p2034 = pneg %p370
        $region102: #{tpu_custom_call.1} parent=67 // pred_check_branch
          %2036 = sbr.rel (%p2034) target = $region104
        $region103: #{tpu_custom_call.1} parent=67 // pred_region
          %s2038 = ssub.s32 256, 256
          %2039 = vsyncadd %s2030, %s2038
          %s2040 = smul.addr %s42, 2
          %s2041 = smul.addr %s2040, 128
          %s2042 = scalar_lea.hbm %s12, %s2041
          %s2043 = sshll.u32 %s2033, 4
          %s2044 = int_to_ptr.vmem [resolvable:$true] %s2043
          %2049 = dma.vmem_to_hbm [thread:$0]  %s2044, 256, %s2042, %s2030, 128, 128, 8
        $region104: #{tpu_custom_call.1} parent=67 // pred_fallthru
          _
      $region68: #{tpu_custom_call.1} parent=5 // pred_fallthru
        _
      %p2050 = scmp.le.s32.totalorder 2, %s33
      // Predicated region
      $region105: #{tpu_custom_call.1} parent=5 // pred_check
        %p2051 = pneg %p2050
      $region106: #{tpu_custom_call.1} parent=5 // pred_check_branch
        %2053 = sbr.rel (%p2051) target = $region108
      $region107: #{tpu_custom_call.1} parent=5 // pred_region
        %s2054 = ssub.s32 %s33, 2
        // Predicated region
        $region109: #{tpu_custom_call.1} parent=107 // pred_check
          %p2055 = pneg %p376
        $region110: #{tpu_custom_call.1} parent=107 // pred_check_branch
          %2057 = sbr.rel (%p2055) target = $region112
        $region111: #{tpu_custom_call.1} parent=107 // pred_region
          %s2058 = sand.u32 %s361, 1
          %s2059 = scalar_lea.sflag [#allocation5], %s2058
          %s2060 = sand.u32 %s361, 1
          %s2061 = smul.addr %s2060, 16
          %s2062 = scalar_lea.vmem [#allocation14], %s2061
          %2063 = dma.done %s2059, 256
        $region112: #{tpu_custom_call.1} parent=107 // pred_fallthru
          _
      $region108: #{tpu_custom_call.1} parent=5 // pred_fallthru
        _
    $region6: #{tpu_custom_call.1} parent=1 // loop_footer
      %s37 = sadd.s32 1, %s33
    $region7: #{tpu_custom_call.1} parent=1 // loop_footer_branch
      %32 = sbr.rel target = $region3
    $region8: #{tpu_custom_call.1} parent=1 // loop_exit
      _
    %2064 = vsyncpa [#allocation4], 1
    %s2065 = scalar_lea.sflag [#allocation4], 1
    %2066 = vsyncpa %s2065, 1
    %2067 = vsyncpa [#allocation7], 1
    %s2068 = scalar_lea.sflag [#allocation7], 1
    %2069 = vsyncpa %s2068, 1
    %2070 = vsyncpa [#allocation10], 1
    %s2071 = scalar_lea.sflag [#allocation10], 1
    %2072 = vsyncpa %s2071, 1
    %2073 = vsyncpa [#allocation13], 1
    %s2074 = scalar_lea.sflag [#allocation13], 1
    %2075 = vsyncpa %s2074, 1
    %2076 = vsyncpa [#allocation5], 1
    %s2077 = scalar_lea.sflag [#allocation5], 1
    %2078 = vsyncpa %s2077, 1

</llo_original>
